<compile_context>
chip_gen: v5e
topology: v5e:2x2
jax: 0.10.0
libtpu: 0.0.40
codegen_flags: <defaults>
</compile_context>

<pallas_src>
import functools

import jax
import jax.numpy as jnp
import numpy as np
from jax import lax
from jax.experimental import pallas as pl
from jax.experimental.pallas import tpu as pltpu


def _sigmoid(v):
    # Numerically stable sigmoid via tanh (EUP op; avoids exp overflow for large |v|).
    return 0.5 * (jnp.tanh(0.5 * v) + 1.0)


def _lesion_attention_kernel(x_ref, w1t_ref, w2t_ref, colmask_ref, rowmask_ref, wsp_ref,
                             o_ref, *, Bb, H, W, K):
    """One batch block, lane-dense (Bb, C, H*W) layout.

    x_ref       : (Bb, C, HW)   VMEM   input block
    w1t_ref     : (C, Cr)       VMEM   first 1x1-conv weight, transposed
    w2t_ref     : (Cr, C)       VMEM   second 1x1-conv weight, transposed
    colmask_ref : (K, 1, HW)    VMEM   column-validity masks (one per kw)
    rowmask_ref : (K, 1, HW)    VMEM   row-validity masks (one per kh)
    wsp_ref     : (2*K*K,)      SMEM   flattened KxK spatial conv weights ([avg taps | max taps])
    o_ref       : (Bb, C, HW)   VMEM   output block
    """
    HW = H * W
    P = (K - 1) // 2

    x = x_ref[...].astype(jnp.float32)                        # (Bb, C, HW)

    # ---- channel attention: global avg/max pool over HW + fused shared MLP ----
    avg = jnp.mean(x, axis=2)                                 # (Bb, C)
    mx = jnp.max(x, axis=2)                                   # (Bb, C)
    pooled = jnp.concatenate([avg, mx], axis=0)               # (2*Bb, C): both branches in one MXU pass
    h = jnp.maximum(jnp.dot(pooled, w1t_ref[...],
                            preferred_element_type=jnp.float32), 0.0)
    z = jnp.dot(h, w2t_ref[...], preferred_element_type=jnp.float32)   # (2*Bb, C)
    ch_att = _sigmoid(z[:Bb] + z[Bb:])                        # (Bb, C)
    xc = x * ch_att[:, :, None]                               # (Bb, C, HW)

    # ---- spatial attention: channel mean/max -> KxK conv (roll + mask) -> sigmoid ----
    avg_sp = jnp.mean(xc, axis=1)                             # (Bb, HW)
    max_sp = jnp.max(xc, axis=1)                              # (Bb, HW)
    s = jnp.concatenate([avg_sp, max_sp], axis=0)             # (2*Bb, HW): sublane-stacked maps

    # Per-sublane selector: 0 for the avg half, 1 for the max half (constant at trace time).
    half = jnp.concatenate([jnp.zeros((Bb, 1), jnp.float32),
                            jnp.ones((Bb, 1), jnp.float32)], axis=0)   # (2*Bb, 1)

    # Column phase: out[i] = s[(i + dx) mod HW]; the column mask kills the wrap-around.
    col_shifted = []
    for kw in range(K):
        dx = kw - P
        v = s if dx == 0 else pltpu.roll(s, shift=(-dx) % HW, axis=1)
        col_shifted.append(colmask_ref[kw] * v)               # (2*Bb, HW)

    # Row phase: per kh accumulate the kw taps with per-half scalar weights (SMEM), then a
    # single roll by kh*W and a single row-mask multiply.
    acc = jnp.zeros((2 * Bb, HW), jnp.float32)
    for kh in range(K):
        dy = kh - P
        c = jnp.zeros((2 * Bb, HW), jnp.float32)
        for kw in range(K):
            t = kh * K + kw
            wa = wsp_ref[t]                                   # weight for the avg channel
            wm = wsp_ref[K * K + t]                           # weight for the max channel
            wvec = wa + (wm - wa) * half                      # (2*Bb, 1) per-half tap weight
            c = c + wvec * col_shifted[kw]
        d = dy * W
        rolled = c if d == 0 else pltpu.roll(c, shift=(-d) % HW, axis=1)
        acc = acc + rowmask_ref[kh] * rolled

    conv = acc[:Bb] + acc[Bb:]                                # (Bb, HW): fold avg/max halves
    sp_att = _sigmoid(conv)
    o_ref[...] = (xc * sp_att[:, None, :]).astype(o_ref.dtype)


def _pick_batch_block(B, max_bb=8):
    """Largest divisor of B (<= max_bb) that still leaves >= 4 grid steps (v7x megacore +
    pipelining), falling back to >= 2 steps, then to whatever divides B."""
    for min_steps in (4, 2, 1):
        cands = [bb for bb in range(1, min(B, max_bb) + 1)
                 if B % bb == 0 and B // bb >= min_steps]
        if cands:
            return max(cands)
    return 1


def lesion_attention(x, w1, w2, w_spatial):
    """x: (B, C, H, W) NCHW; w1: (C//r, C); w2: (C, C//r); w_spatial: (1, 2, K, K)."""
    B, C, H, W = x.shape
    Cr = w1.shape[0]
    K = w_spatial.shape[-1]
    P = (K - 1) // 2
    HW = H * W

    Bb = _pick_batch_block(B)

    xf = x.reshape(B, C, HW)                                  # lane-dense layout (free reshape)
    w1t = jnp.transpose(w1).astype(jnp.float32)               # (C, Cr)
    w2t = jnp.transpose(w2).astype(jnp.float32)               # (Cr, C)
    wsp = w_spatial.reshape(-1).astype(jnp.float32)           # (2*K*K,)

    # Exact integer validity masks for the flattened-roll conv, precomputed on the host.
    cols = np.arange(HW) % W
    rows = np.arange(HW) // W
    colmask_np = np.zeros((K, 1, HW), np.float32)
    rowmask_np = np.zeros((K, 1, HW), np.float32)
    for kk in range(K):
        d = kk - P
        colmask_np[kk, 0] = ((cols + d >= 0) & (cols + d < W)).astype(np.float32)
        rowmask_np[kk, 0] = ((rows + d >= 0) & (rows + d < H)).astype(np.float32)
    colmask = jnp.asarray(colmask_np)
    rowmask = jnp.asarray(rowmask_np)

    # VMEM budget: the in/out blocks are double-buffered by the pipeline; leave headroom.
    # TODO(synk): for production sizes (C>=256, H=W>=64) tile the C/HW axes instead of taking a
    # full (C, HW) block and make this cap generation-aware (v7x has only 64 MiB physical VMEM).
    block_bytes = Bb * C * HW * 4
    vmem_limit = int(min(max(8 * block_bytes + (8 << 20), 32 << 20), 48 << 20))

    kernel = functools.partial(_lesion_attention_kernel, Bb=Bb, H=H, W=W, K=K)

    out = pl.pallas_call(
        kernel,
        out_shape=jax.ShapeDtypeStruct((B, C, HW), x.dtype),
        grid_spec=pltpu.PrefetchScalarGridSpec(
            num_scalar_prefetch=0,
            grid=(B // Bb,),
            in_specs=[
                pl.BlockSpec((Bb, C, HW), lambda b: (b, 0, 0)),        # x, lane-dense
                pl.BlockSpec((C, Cr), lambda b: (0, 0)),               # w1^T
                pl.BlockSpec((Cr, C), lambda b: (0, 0)),               # w2^T
                pl.BlockSpec((K, 1, HW), lambda b: (0, 0, 0)),         # column masks
                pl.BlockSpec((K, 1, HW), lambda b: (0, 0, 0)),         # row masks
                pl.BlockSpec(memory_space=pltpu.MemorySpace.SMEM),     # spatial conv weights
            ],
            out_specs=pl.BlockSpec((Bb, C, HW), lambda b: (b, 0, 0)),
        ),
        # Batch steps are fully independent -> shard the grid across TensorCores on v7x.
        compiler_params=pltpu.CompilerParams(
            dimension_semantics=("parallel",),
            vmem_limit_bytes=vmem_limit,
        ),
        # TODO(synk): at production sizes consider pipeline_mode=pl.Buffered(3) on the x spec
        # if the input DMA is still exposed after re-tiling.
    )(xf, w1t, w2t, colmask, rowmask, wsp)

    return out.reshape(B, C, H, W)


def reference(x, w1, w2, w_spatial):
    """Pure-JAX reference matching the PyTorch forward."""
    K = w_spatial.shape[-1]
    P = (K - 1) // 2
    avg = jnp.mean(x, axis=(2, 3), keepdims=True)
    mx = jnp.max(x, axis=(2, 3), keepdims=True)

    def mlp(p):
        h = jnp.einsum('oc,bcij->boij', w1, p)
        h = jnp.maximum(h, 0.0)
        return jnp.einsum('oc,bcij->boij', w2, h)

    ch = jax.nn.sigmoid(mlp(avg) + mlp(mx))
    xc = x * ch
    a = jnp.mean(xc, axis=1, keepdims=True)
    m = jnp.max(xc, axis=1, keepdims=True)
    s_in = jnp.concatenate([a, m], axis=1)
    conv = jax.lax.conv_general_dilated(
        s_in, w_spatial, window_strides=(1, 1), padding=((P, P), (P, P)),
        dimension_numbers=('NCHW', 'OIHW', 'NCHW'))
    return xc * jax.nn.sigmoid(conv)


if __name__ == "__main__":
    B, C, H, W = 2, 16, 16, 16
    reduction_ratio, K = 8, 7
    Cr = C // reduction_ratio

    key = jax.random.PRNGKey(0)
    k1, k2, k3, kx = jax.random.split(key, 4)
    # Conv2d 1x1 weights (no bias) behave as plain linear weights.
    w1 = jax.random.normal(k1, (Cr, C), jnp.float32) * 0.1
    w2 = jax.random.normal(k2, (C, Cr), jnp.float32) * 0.1
    w_spatial = jax.random.normal(k3, (1, 2, K, K), jnp.float32) * 0.1
    x = jax.random.normal(kx, (B, C, H, W), jnp.float32)

    out = jax.block_until_ready(lesion_attention(x, w1, w2, w_spatial))
    ref = jax.block_until_ready(reference(x, w1, w2, w_spatial))

    assert out.shape == ref.shape == (B, C, H, W)
    np.testing.assert_allclose(np.asarray(out), np.asarray(ref), rtol=1e-4, atol=1e-4)

    print("KERNEL_OK")
</pallas_src>

<mosaic_0001>
module attributes {stable_mosaic.version = 11 : i64} {
  func.func @_lesion_attention_kernel(%arg0: i32, %arg1: memref<1x16x256xf32, #tpu.memory_space<vmem>>, %arg2: memref<16x2xf32, #tpu.memory_space<vmem>>, %arg3: memref<2x16xf32, #tpu.memory_space<vmem>>, %arg4: memref<7x1x256xf32, #tpu.memory_space<vmem>>, %arg5: memref<7x1x256xf32, #tpu.memory_space<vmem>>, %arg6: memref<98xf32, #tpu.memory_space<smem>>, %arg7: memref<1x16x256xf32, #tpu.memory_space<vmem>>) attributes {dimension_semantics = [#tpu.dimension_semantics<parallel>], iteration_bounds = array<i64: 2>, scalar_prefetch = 0 : i64, scratch_operands = 0 : i64, tpu.core_type = #tpu.core_type<tc>, window_params = [{transform_indices = @transform_0, window_bounds = array<i64: 1, 16, 256>}, {pipeline_mode = #tpu.pipeline_mode<synchronous>, transform_indices = @transform_1, window_bounds = array<i64: 16, 2>}, {pipeline_mode = #tpu.pipeline_mode<synchronous>, transform_indices = @transform_2, window_bounds = array<i64: 2, 16>}, {pipeline_mode = #tpu.pipeline_mode<synchronous>, transform_indices = @transform_3, window_bounds = array<i64: 7, 1, 256>}, {pipeline_mode = #tpu.pipeline_mode<synchronous>, transform_indices = @transform_4, window_bounds = array<i64: 7, 1, 256>}, {transform_indices = @transform_5, window_bounds = array<i64: 98>}, {transform_indices = @transform_6, window_bounds = array<i64: 1, 16, 256>}]} {
    %c0 = arith.constant 0 : index
    %c0_0 = arith.constant 0 : index
    %c0_1 = arith.constant 0 : index
    %0 = vector.load %arg1[%c0, %c0_0, %c0_1] : memref<1x16x256xf32, #tpu.memory_space<vmem>>, vector<1x16x256xf32>
    %cst = arith.constant dense<0.000000e+00> : vector<1x16xf32>
    %1 = vector.multi_reduction <add>, %0, %cst [2] : vector<1x16x256xf32> to vector<1x16xf32>
    %cst_2 = arith.constant 2.560000e+02 : f32
    %2 = vector.broadcast %cst_2 : f32 to vector<1x16xf32>
    %3 = arith.divf %1, %2 : vector<1x16xf32>
    %cst_3 = arith.constant dense<0xFF800000> : vector<1x16xf32>
    %4 = vector.multi_reduction <maximumf>, %0, %cst_3 [2] : vector<1x16x256xf32> to vector<1x16xf32>
    %5 = tpu.concatenate %3, %4 in 0 : vector<1x16xf32>, vector<1x16xf32> -> vector<2x16xf32>
    %c0_4 = arith.constant 0 : index
    %c0_5 = arith.constant 0 : index
    %6 = vector.load %arg2[%c0_4, %c0_5] : memref<16x2xf32, #tpu.memory_space<vmem>>, vector<16x2xf32>
    %cst_6 = arith.constant dense<0.000000e+00> : vector<2x2xf32>
    %7 = tpu.matmul %5, %6, %cst_6 {dimension_numbers = #tpu.dot_dimension_numbers<[1], [0], [0], [1], [0, 0, 1, 1], [], []>} : vector<2x16xf32>, vector<16x2xf32>, vector<2x2xf32> -> vector<2x2xf32>
    %cst_7 = arith.constant 0.000000e+00 : f32
    %8 = vector.broadcast %cst_7 : f32 to vector<2x2xf32>
    %9 = arith.maximumf %7, %8 : vector<2x2xf32>
    %c0_8 = arith.constant 0 : index
    %c0_9 = arith.constant 0 : index
    %10 = vector.load %arg3[%c0_8, %c0_9] : memref<2x16xf32, #tpu.memory_space<vmem>>, vector<2x16xf32>
    %cst_10 = arith.constant dense<0.000000e+00> : vector<2x16xf32>
    %11 = tpu.matmul %9, %10, %cst_10 {dimension_numbers = #tpu.dot_dimension_numbers<[1], [0], [0], [1], [0, 0, 1, 1], [], []>} : vector<2x2xf32>, vector<2x16xf32>, vector<2x16xf32> -> vector<2x16xf32>
    %12 = vector.extract_strided_slice %11 {offsets = [0, 0], sizes = [1, 16], strides = [1, 1]} : vector<2x16xf32> to vector<1x16xf32>
    %13 = vector.extract_strided_slice %11 {offsets = [1, 0], sizes = [1, 16], strides = [1, 1]} : vector<2x16xf32> to vector<1x16xf32>
    %14 = arith.addf %12, %13 : vector<1x16xf32>
    %cst_11 = arith.constant 5.000000e-01 : f32
    %15 = vector.broadcast %cst_11 : f32 to vector<1x16xf32>
    %16 = arith.mulf %15, %14 : vector<1x16xf32>
    %17 = math.tanh %16 : vector<1x16xf32>
    %cst_12 = arith.constant 1.000000e+00 : f32
    %18 = vector.broadcast %cst_12 : f32 to vector<1x16xf32>
    %19 = arith.addf %17, %18 : vector<1x16xf32>
    %cst_13 = arith.constant 5.000000e-01 : f32
    %20 = vector.broadcast %cst_13 : f32 to vector<1x16xf32>
    %21 = arith.mulf %20, %19 : vector<1x16xf32>
    %22 = vector.shape_cast %21 : vector<1x16xf32> to vector<1x16x1xf32>
    %23 = vector.broadcast %22 : vector<1x16x1xf32> to vector<1x16x256xf32>
    %24 = arith.mulf %0, %23 : vector<1x16x256xf32>
    %cst_14 = arith.constant dense<0.000000e+00> : vector<1x256xf32>
    %25 = vector.multi_reduction <add>, %24, %cst_14 [1] : vector<1x16x256xf32> to vector<1x256xf32>
    %cst_15 = arith.constant 1.600000e+01 : f32
    %26 = vector.broadcast %cst_15 : f32 to vector<1x256xf32>
    %27 = arith.divf %25, %26 : vector<1x256xf32>
    %cst_16 = arith.constant dense<0xFF800000> : vector<1x256xf32>
    %28 = vector.multi_reduction <maximumf>, %24, %cst_16 [1] : vector<1x16x256xf32> to vector<1x256xf32>
    %29 = tpu.concatenate %27, %28 in 0 : vector<1x256xf32>, vector<1x256xf32> -> vector<2x256xf32>
    %cst_17 = arith.constant 0.000000e+00 : f32
    %30 = vector.broadcast %cst_17 : f32 to vector<1x1xf32>
    %cst_18 = arith.constant 1.000000e+00 : f32
    %31 = vector.broadcast %cst_18 : f32 to vector<1x1xf32>
    %32 = tpu.concatenate %30, %31 in 0 : vector<1x1xf32>, vector<1x1xf32> -> vector<2x1xf32>
    %c3_i32 = arith.constant 3 : i32
    %33 = tpu.dynamic_rotate %29 by %c3_i32 dim 1 : vector<2x256xf32>, i32 -> vector<2x256xf32>
    %c0_19 = arith.constant 0 : index
    %c0_20 = arith.constant 0 : index
    %c0_21 = arith.constant 0 : index
    %34 = vector.load %arg4[%c0_19, %c0_20, %c0_21] : memref<7x1x256xf32, #tpu.memory_space<vmem>>, vector<1x1x256xf32>
    %35 = vector.shape_cast %34 : vector<1x1x256xf32> to vector<1x256xf32>
    %36 = vector.broadcast %35 : vector<1x256xf32> to vector<2x256xf32>
    %37 = arith.mulf %36, %33 : vector<2x256xf32>
    %c2_i32 = arith.constant 2 : i32
    %38 = tpu.dynamic_rotate %29 by %c2_i32 dim 1 : vector<2x256xf32>, i32 -> vector<2x256xf32>
    %c1 = arith.constant 1 : index
    %c0_22 = arith.constant 0 : index
    %c0_23 = arith.constant 0 : index
    %39 = vector.load %arg4[%c1, %c0_22, %c0_23] : memref<7x1x256xf32, #tpu.memory_space<vmem>>, vector<1x1x256xf32>
    %40 = vector.shape_cast %39 : vector<1x1x256xf32> to vector<1x256xf32>
    %41 = vector.broadcast %40 : vector<1x256xf32> to vector<2x256xf32>
    %42 = arith.mulf %41, %38 : vector<2x256xf32>
    %c1_i32 = arith.constant 1 : i32
    %43 = tpu.dynamic_rotate %29 by %c1_i32 dim 1 : vector<2x256xf32>, i32 -> vector<2x256xf32>
    %c2 = arith.constant 2 : index
    %c0_24 = arith.constant 0 : index
    %c0_25 = arith.constant 0 : index
    %44 = vector.load %arg4[%c2, %c0_24, %c0_25] : memref<7x1x256xf32, #tpu.memory_space<vmem>>, vector<1x1x256xf32>
    %45 = vector.shape_cast %44 : vector<1x1x256xf32> to vector<1x256xf32>
    %46 = vector.broadcast %45 : vector<1x256xf32> to vector<2x256xf32>
    %47 = arith.mulf %46, %43 : vector<2x256xf32>
    %c3 = arith.constant 3 : index
    %c0_26 = arith.constant 0 : index
    %c0_27 = arith.constant 0 : index
    %48 = vector.load %arg4[%c3, %c0_26, %c0_27] : memref<7x1x256xf32, #tpu.memory_space<vmem>>, vector<1x1x256xf32>
    %49 = vector.shape_cast %48 : vector<1x1x256xf32> to vector<1x256xf32>
    %50 = vector.broadcast %49 : vector<1x256xf32> to vector<2x256xf32>
    %51 = arith.mulf %50, %29 : vector<2x256xf32>
    %c255_i32 = arith.constant 255 : i32
    %52 = tpu.dynamic_rotate %29 by %c255_i32 dim 1 : vector<2x256xf32>, i32 -> vector<2x256xf32>
    %c4 = arith.constant 4 : index
    %c0_28 = arith.constant 0 : index
    %c0_29 = arith.constant 0 : index
    %53 = vector.load %arg4[%c4, %c0_28, %c0_29] : memref<7x1x256xf32, #tpu.memory_space<vmem>>, vector<1x1x256xf32>
    %54 = vector.shape_cast %53 : vector<1x1x256xf32> to vector<1x256xf32>
    %55 = vector.broadcast %54 : vector<1x256xf32> to vector<2x256xf32>
    %56 = arith.mulf %55, %52 : vector<2x256xf32>
    %c254_i32 = arith.constant 254 : i32
    %57 = tpu.dynamic_rotate %29 by %c254_i32 dim 1 : vector<2x256xf32>, i32 -> vector<2x256xf32>
    %c5 = arith.constant 5 : index
    %c0_30 = arith.constant 0 : index
    %c0_31 = arith.constant 0 : index
    %58 = vector.load %arg4[%c5, %c0_30, %c0_31] : memref<7x1x256xf32, #tpu.memory_space<vmem>>, vector<1x1x256xf32>
    %59 = vector.shape_cast %58 : vector<1x1x256xf32> to vector<1x256xf32>
    %60 = vector.broadcast %59 : vector<1x256xf32> to vector<2x256xf32>
    %61 = arith.mulf %60, %57 : vector<2x256xf32>
    %c253_i32 = arith.constant 253 : i32
    %62 = tpu.dynamic_rotate %29 by %c253_i32 dim 1 : vector<2x256xf32>, i32 -> vector<2x256xf32>
    %c6 = arith.constant 6 : index
    %c0_32 = arith.constant 0 : index
    %c0_33 = arith.constant 0 : index
    %63 = vector.load %arg4[%c6, %c0_32, %c0_33] : memref<7x1x256xf32, #tpu.memory_space<vmem>>, vector<1x1x256xf32>
    %64 = vector.shape_cast %63 : vector<1x1x256xf32> to vector<1x256xf32>
    %65 = vector.broadcast %64 : vector<1x256xf32> to vector<2x256xf32>
    %66 = arith.mulf %65, %62 : vector<2x256xf32>
    %cst_34 = arith.constant 0.000000e+00 : f32
    %67 = vector.broadcast %cst_34 : f32 to vector<2x256xf32>
    %cst_35 = arith.constant 0.000000e+00 : f32
    %68 = vector.broadcast %cst_35 : f32 to vector<2x256xf32>
    %c0_36 = arith.constant 0 : index
    %69 = memref.load %arg6[%c0_36] : memref<98xf32, #tpu.memory_space<smem>>
    %c49 = arith.constant 49 : index
    %70 = memref.load %arg6[%c49] : memref<98xf32, #tpu.memory_space<smem>>
    %71 = arith.subf %70, %69 : f32
    %72 = vector.broadcast %71 : f32 to vector<2x1xf32>
    %73 = arith.mulf %72, %32 : vector<2x1xf32>
    %74 = vector.broadcast %69 : f32 to vector<2x1xf32>
    %75 = arith.addf %74, %73 : vector<2x1xf32>
    %76 = vector.broadcast %75 : vector<2x1xf32> to vector<2x256xf32>
    %77 = arith.mulf %76, %37 : vector<2x256xf32>
    %78 = arith.addf %68, %77 : vector<2x256xf32>
    %c1_37 = arith.constant 1 : index
    %79 = memref.load %arg6[%c1_37] : memref<98xf32, #tpu.memory_space<smem>>
    %c50 = arith.constant 50 : index
    %80 = memref.load %arg6[%c50] : memref<98xf32, #tpu.memory_space<smem>>
    %81 = arith.subf %80, %79 : f32
    %82 = vector.broadcast %81 : f32 to vector<2x1xf32>
    %83 = arith.mulf %82, %32 : vector<2x1xf32>
    %84 = vector.broadcast %79 : f32 to vector<2x1xf32>
    %85 = arith.addf %84, %83 : vector<2x1xf32>
    %86 = vector.broadcast %85 : vector<2x1xf32> to vector<2x256xf32>
    %87 = arith.mulf %86, %42 : vector<2x256xf32>
    %88 = arith.addf %78, %87 : vector<2x256xf32>
    %c2_38 = arith.constant 2 : index
    %89 = memref.load %arg6[%c2_38] : memref<98xf32, #tpu.memory_space<smem>>
    %c51 = arith.constant 51 : index
    %90 = memref.load %arg6[%c51] : memref<98xf32, #tpu.memory_space<smem>>
    %91 = arith.subf %90, %89 : f32
    %92 = vector.broadcast %91 : f32 to vector<2x1xf32>
    %93 = arith.mulf %92, %32 : vector<2x1xf32>
    %94 = vector.broadcast %89 : f32 to vector<2x1xf32>
    %95 = arith.addf %94, %93 : vector<2x1xf32>
    %96 = vector.broadcast %95 : vector<2x1xf32> to vector<2x256xf32>
    %97 = arith.mulf %96, %47 : vector<2x256xf32>
    %98 = arith.addf %88, %97 : vector<2x256xf32>
    %c3_39 = arith.constant 3 : index
    %99 = memref.load %arg6[%c3_39] : memref<98xf32, #tpu.memory_space<smem>>
    %c52 = arith.constant 52 : index
    %100 = memref.load %arg6[%c52] : memref<98xf32, #tpu.memory_space<smem>>
    %101 = arith.subf %100, %99 : f32
    %102 = vector.broadcast %101 : f32 to vector<2x1xf32>
    %103 = arith.mulf %102, %32 : vector<2x1xf32>
    %104 = vector.broadcast %99 : f32 to vector<2x1xf32>
    %105 = arith.addf %104, %103 : vector<2x1xf32>
    %106 = vector.broadcast %105 : vector<2x1xf32> to vector<2x256xf32>
    %107 = arith.mulf %106, %51 : vector<2x256xf32>
    %108 = arith.addf %98, %107 : vector<2x256xf32>
    %c4_40 = arith.constant 4 : index
    %109 = memref.load %arg6[%c4_40] : memref<98xf32, #tpu.memory_space<smem>>
    %c53 = arith.constant 53 : index
    %110 = memref.load %arg6[%c53] : memref<98xf32, #tpu.memory_space<smem>>
    %111 = arith.subf %110, %109 : f32
    %112 = vector.broadcast %111 : f32 to vector<2x1xf32>
    %113 = arith.mulf %112, %32 : vector<2x1xf32>
    %114 = vector.broadcast %109 : f32 to vector<2x1xf32>
    %115 = arith.addf %114, %113 : vector<2x1xf32>
    %116 = vector.broadcast %115 : vector<2x1xf32> to vector<2x256xf32>
    %117 = arith.mulf %116, %56 : vector<2x256xf32>
    %118 = arith.addf %108, %117 : vector<2x256xf32>
    %c5_41 = arith.constant 5 : index
    %119 = memref.load %arg6[%c5_41] : memref<98xf32, #tpu.memory_space<smem>>
    %c54 = arith.constant 54 : index
    %120 = memref.load %arg6[%c54] : memref<98xf32, #tpu.memory_space<smem>>
    %121 = arith.subf %120, %119 : f32
    %122 = vector.broadcast %121 : f32 to vector<2x1xf32>
    %123 = arith.mulf %122, %32 : vector<2x1xf32>
    %124 = vector.broadcast %119 : f32 to vector<2x1xf32>
    %125 = arith.addf %124, %123 : vector<2x1xf32>
    %126 = vector.broadcast %125 : vector<2x1xf32> to vector<2x256xf32>
    %127 = arith.mulf %126, %61 : vector<2x256xf32>
    %128 = arith.addf %118, %127 : vector<2x256xf32>
    %c6_42 = arith.constant 6 : index
    %129 = memref.load %arg6[%c6_42] : memref<98xf32, #tpu.memory_space<smem>>
    %c55 = arith.constant 55 : index
    %130 = memref.load %arg6[%c55] : memref<98xf32, #tpu.memory_space<smem>>
    %131 = arith.subf %130, %129 : f32
    %132 = vector.broadcast %131 : f32 to vector<2x1xf32>
    %133 = arith.mulf %132, %32 : vector<2x1xf32>
    %134 = vector.broadcast %129 : f32 to vector<2x1xf32>
    %135 = arith.addf %134, %133 : vector<2x1xf32>
    %136 = vector.broadcast %135 : vector<2x1xf32> to vector<2x256xf32>
    %137 = arith.mulf %136, %66 : vector<2x256xf32>
    %138 = arith.addf %128, %137 : vector<2x256xf32>
    %c48_i32 = arith.constant 48 : i32
    %139 = tpu.dynamic_rotate %138 by %c48_i32 dim 1 : vector<2x256xf32>, i32 -> vector<2x256xf32>
    %c0_43 = arith.constant 0 : index
    %c0_44 = arith.constant 0 : index
    %c0_45 = arith.constant 0 : index
    %140 = vector.load %arg5[%c0_43, %c0_44, %c0_45] : memref<7x1x256xf32, #tpu.memory_space<vmem>>, vector<1x1x256xf32>
    %141 = vector.shape_cast %140 : vector<1x1x256xf32> to vector<1x256xf32>
    %142 = vector.broadcast %141 : vector<1x256xf32> to vector<2x256xf32>
    %143 = arith.mulf %142, %139 : vector<2x256xf32>
    %144 = arith.addf %67, %143 : vector<2x256xf32>
    %cst_46 = arith.constant 0.000000e+00 : f32
    %145 = vector.broadcast %cst_46 : f32 to vector<2x256xf32>
    %c7 = arith.constant 7 : index
    %146 = memref.load %arg6[%c7] : memref<98xf32, #tpu.memory_space<smem>>
    %c56 = arith.constant 56 : index
    %147 = memref.load %arg6[%c56] : memref<98xf32, #tpu.memory_space<smem>>
    %148 = arith.subf %147, %146 : f32
    %149 = vector.broadcast %148 : f32 to vector<2x1xf32>
    %150 = arith.mulf %149, %32 : vector<2x1xf32>
    %151 = vector.broadcast %146 : f32 to vector<2x1xf32>
    %152 = arith.addf %151, %150 : vector<2x1xf32>
    %153 = vector.broadcast %152 : vector<2x1xf32> to vector<2x256xf32>
    %154 = arith.mulf %153, %37 : vector<2x256xf32>
    %155 = arith.addf %145, %154 : vector<2x256xf32>
    %c8 = arith.constant 8 : index
    %156 = memref.load %arg6[%c8] : memref<98xf32, #tpu.memory_space<smem>>
    %c57 = arith.constant 57 : index
    %157 = memref.load %arg6[%c57] : memref<98xf32, #tpu.memory_space<smem>>
    %158 = arith.subf %157, %156 : f32
    %159 = vector.broadcast %158 : f32 to vector<2x1xf32>
    %160 = arith.mulf %159, %32 : vector<2x1xf32>
    %161 = vector.broadcast %156 : f32 to vector<2x1xf32>
    %162 = arith.addf %161, %160 : vector<2x1xf32>
    %163 = vector.broadcast %162 : vector<2x1xf32> to vector<2x256xf32>
    %164 = arith.mulf %163, %42 : vector<2x256xf32>
    %165 = arith.addf %155, %164 : vector<2x256xf32>
    %c9 = arith.constant 9 : index
    %166 = memref.load %arg6[%c9] : memref<98xf32, #tpu.memory_space<smem>>
    %c58 = arith.constant 58 : index
    %167 = memref.load %arg6[%c58] : memref<98xf32, #tpu.memory_space<smem>>
    %168 = arith.subf %167, %166 : f32
    %169 = vector.broadcast %168 : f32 to vector<2x1xf32>
    %170 = arith.mulf %169, %32 : vector<2x1xf32>
    %171 = vector.broadcast %166 : f32 to vector<2x1xf32>
    %172 = arith.addf %171, %170 : vector<2x1xf32>
    %173 = vector.broadcast %172 : vector<2x1xf32> to vector<2x256xf32>
    %174 = arith.mulf %173, %47 : vector<2x256xf32>
    %175 = arith.addf %165, %174 : vector<2x256xf32>
    %c10 = arith.constant 10 : index
    %176 = memref.load %arg6[%c10] : memref<98xf32, #tpu.memory_space<smem>>
    %c59 = arith.constant 59 : index
    %177 = memref.load %arg6[%c59] : memref<98xf32, #tpu.memory_space<smem>>
    %178 = arith.subf %177, %176 : f32
    %179 = vector.broadcast %178 : f32 to vector<2x1xf32>
    %180 = arith.mulf %179, %32 : vector<2x1xf32>
    %181 = vector.broadcast %176 : f32 to vector<2x1xf32>
    %182 = arith.addf %181, %180 : vector<2x1xf32>
    %183 = vector.broadcast %182 : vector<2x1xf32> to vector<2x256xf32>
    %184 = arith.mulf %183, %51 : vector<2x256xf32>
    %185 = arith.addf %175, %184 : vector<2x256xf32>
    %c11 = arith.constant 11 : index
    %186 = memref.load %arg6[%c11] : memref<98xf32, #tpu.memory_space<smem>>
    %c60 = arith.constant 60 : index
    %187 = memref.load %arg6[%c60] : memref<98xf32, #tpu.memory_space<smem>>
    %188 = arith.subf %187, %186 : f32
    %189 = vector.broadcast %188 : f32 to vector<2x1xf32>
    %190 = arith.mulf %189, %32 : vector<2x1xf32>
    %191 = vector.broadcast %186 : f32 to vector<2x1xf32>
    %192 = arith.addf %191, %190 : vector<2x1xf32>
    %193 = vector.broadcast %192 : vector<2x1xf32> to vector<2x256xf32>
    %194 = arith.mulf %193, %56 : vector<2x256xf32>
    %195 = arith.addf %185, %194 : vector<2x256xf32>
    %c12 = arith.constant 12 : index
    %196 = memref.load %arg6[%c12] : memref<98xf32, #tpu.memory_space<smem>>
    %c61 = arith.constant 61 : index
    %197 = memref.load %arg6[%c61] : memref<98xf32, #tpu.memory_space<smem>>
    %198 = arith.subf %197, %196 : f32
    %199 = vector.broadcast %198 : f32 to vector<2x1xf32>
    %200 = arith.mulf %199, %32 : vector<2x1xf32>
    %201 = vector.broadcast %196 : f32 to vector<2x1xf32>
    %202 = arith.addf %201, %200 : vector<2x1xf32>
    %203 = vector.broadcast %202 : vector<2x1xf32> to vector<2x256xf32>
    %204 = arith.mulf %203, %61 : vector<2x256xf32>
    %205 = arith.addf %195, %204 : vector<2x256xf32>
    %c13 = arith.constant 13 : index
    %206 = memref.load %arg6[%c13] : memref<98xf32, #tpu.memory_space<smem>>
    %c62 = arith.constant 62 : index
    %207 = memref.load %arg6[%c62] : memref<98xf32, #tpu.memory_space<smem>>
    %208 = arith.subf %207, %206 : f32
    %209 = vector.broadcast %208 : f32 to vector<2x1xf32>
    %210 = arith.mulf %209, %32 : vector<2x1xf32>
    %211 = vector.broadcast %206 : f32 to vector<2x1xf32>
    %212 = arith.addf %211, %210 : vector<2x1xf32>
    %213 = vector.broadcast %212 : vector<2x1xf32> to vector<2x256xf32>
    %214 = arith.mulf %213, %66 : vector<2x256xf32>
    %215 = arith.addf %205, %214 : vector<2x256xf32>
    %c32_i32 = arith.constant 32 : i32
    %216 = tpu.dynamic_rotate %215 by %c32_i32 dim 1 : vector<2x256xf32>, i32 -> vector<2x256xf32>
    %c1_47 = arith.constant 1 : index
    %c0_48 = arith.constant 0 : index
    %c0_49 = arith.constant 0 : index
    %217 = vector.load %arg5[%c1_47, %c0_48, %c0_49] : memref<7x1x256xf32, #tpu.memory_space<vmem>>, vector<1x1x256xf32>
    %218 = vector.shape_cast %217 : vector<1x1x256xf32> to vector<1x256xf32>
    %219 = vector.broadcast %218 : vector<1x256xf32> to vector<2x256xf32>
    %220 = arith.mulf %219, %216 : vector<2x256xf32>
    %221 = arith.addf %144, %220 : vector<2x256xf32>
    %cst_50 = arith.constant 0.000000e+00 : f32
    %222 = vector.broadcast %cst_50 : f32 to vector<2x256xf32>
    %c14 = arith.constant 14 : index
    %223 = memref.load %arg6[%c14] : memref<98xf32, #tpu.memory_space<smem>>
    %c63 = arith.constant 63 : index
    %224 = memref.load %arg6[%c63] : memref<98xf32, #tpu.memory_space<smem>>
    %225 = arith.subf %224, %223 : f32
    %226 = vector.broadcast %225 : f32 to vector<2x1xf32>
    %227 = arith.mulf %226, %32 : vector<2x1xf32>
    %228 = vector.broadcast %223 : f32 to vector<2x1xf32>
    %229 = arith.addf %228, %227 : vector<2x1xf32>
    %230 = vector.broadcast %229 : vector<2x1xf32> to vector<2x256xf32>
    %231 = arith.mulf %230, %37 : vector<2x256xf32>
    %232 = arith.addf %222, %231 : vector<2x256xf32>
    %c15 = arith.constant 15 : index
    %233 = memref.load %arg6[%c15] : memref<98xf32, #tpu.memory_space<smem>>
    %c64 = arith.constant 64 : index
    %234 = memref.load %arg6[%c64] : memref<98xf32, #tpu.memory_space<smem>>
    %235 = arith.subf %234, %233 : f32
    %236 = vector.broadcast %235 : f32 to vector<2x1xf32>
    %237 = arith.mulf %236, %32 : vector<2x1xf32>
    %238 = vector.broadcast %233 : f32 to vector<2x1xf32>
    %239 = arith.addf %238, %237 : vector<2x1xf32>
    %240 = vector.broadcast %239 : vector<2x1xf32> to vector<2x256xf32>
    %241 = arith.mulf %240, %42 : vector<2x256xf32>
    %242 = arith.addf %232, %241 : vector<2x256xf32>
    %c16 = arith.constant 16 : index
    %243 = memref.load %arg6[%c16] : memref<98xf32, #tpu.memory_space<smem>>
    %c65 = arith.constant 65 : index
    %244 = memref.load %arg6[%c65] : memref<98xf32, #tpu.memory_space<smem>>
    %245 = arith.subf %244, %243 : f32
    %246 = vector.broadcast %245 : f32 to vector<2x1xf32>
    %247 = arith.mulf %246, %32 : vector<2x1xf32>
    %248 = vector.broadcast %243 : f32 to vector<2x1xf32>
    %249 = arith.addf %248, %247 : vector<2x1xf32>
    %250 = vector.broadcast %249 : vector<2x1xf32> to vector<2x256xf32>
    %251 = arith.mulf %250, %47 : vector<2x256xf32>
    %252 = arith.addf %242, %251 : vector<2x256xf32>
    %c17 = arith.constant 17 : index
    %253 = memref.load %arg6[%c17] : memref<98xf32, #tpu.memory_space<smem>>
    %c66 = arith.constant 66 : index
    %254 = memref.load %arg6[%c66] : memref<98xf32, #tpu.memory_space<smem>>
    %255 = arith.subf %254, %253 : f32
    %256 = vector.broadcast %255 : f32 to vector<2x1xf32>
    %257 = arith.mulf %256, %32 : vector<2x1xf32>
    %258 = vector.broadcast %253 : f32 to vector<2x1xf32>
    %259 = arith.addf %258, %257 : vector<2x1xf32>
    %260 = vector.broadcast %259 : vector<2x1xf32> to vector<2x256xf32>
    %261 = arith.mulf %260, %51 : vector<2x256xf32>
    %262 = arith.addf %252, %261 : vector<2x256xf32>
    %c18 = arith.constant 18 : index
    %263 = memref.load %arg6[%c18] : memref<98xf32, #tpu.memory_space<smem>>
    %c67 = arith.constant 67 : index
    %264 = memref.load %arg6[%c67] : memref<98xf32, #tpu.memory_space<smem>>
    %265 = arith.subf %264, %263 : f32
    %266 = vector.broadcast %265 : f32 to vector<2x1xf32>
    %267 = arith.mulf %266, %32 : vector<2x1xf32>
    %268 = vector.broadcast %263 : f32 to vector<2x1xf32>
    %269 = arith.addf %268, %267 : vector<2x1xf32>
    %270 = vector.broadcast %269 : vector<2x1xf32> to vector<2x256xf32>
    %271 = arith.mulf %270, %56 : vector<2x256xf32>
    %272 = arith.addf %262, %271 : vector<2x256xf32>
    %c19 = arith.constant 19 : index
    %273 = memref.load %arg6[%c19] : memref<98xf32, #tpu.memory_space<smem>>
    %c68 = arith.constant 68 : index
    %274 = memref.load %arg6[%c68] : memref<98xf32, #tpu.memory_space<smem>>
    %275 = arith.subf %274, %273 : f32
    %276 = vector.broadcast %275 : f32 to vector<2x1xf32>
    %277 = arith.mulf %276, %32 : vector<2x1xf32>
    %278 = vector.broadcast %273 : f32 to vector<2x1xf32>
    %279 = arith.addf %278, %277 : vector<2x1xf32>
    %280 = vector.broadcast %279 : vector<2x1xf32> to vector<2x256xf32>
    %281 = arith.mulf %280, %61 : vector<2x256xf32>
    %282 = arith.addf %272, %281 : vector<2x256xf32>
    %c20 = arith.constant 20 : index
    %283 = memref.load %arg6[%c20] : memref<98xf32, #tpu.memory_space<smem>>
    %c69 = arith.constant 69 : index
    %284 = memref.load %arg6[%c69] : memref<98xf32, #tpu.memory_space<smem>>
    %285 = arith.subf %284, %283 : f32
    %286 = vector.broadcast %285 : f32 to vector<2x1xf32>
    %287 = arith.mulf %286, %32 : vector<2x1xf32>
    %288 = vector.broadcast %283 : f32 to vector<2x1xf32>
    %289 = arith.addf %288, %287 : vector<2x1xf32>
    %290 = vector.broadcast %289 : vector<2x1xf32> to vector<2x256xf32>
    %291 = arith.mulf %290, %66 : vector<2x256xf32>
    %292 = arith.addf %282, %291 : vector<2x256xf32>
    %c16_i32 = arith.constant 16 : i32
    %293 = tpu.dynamic_rotate %292 by %c16_i32 dim 1 : vector<2x256xf32>, i32 -> vector<2x256xf32>
    %c2_51 = arith.constant 2 : index
    %c0_52 = arith.constant 0 : index
    %c0_53 = arith.constant 0 : index
    %294 = vector.load %arg5[%c2_51, %c0_52, %c0_53] : memref<7x1x256xf32, #tpu.memory_space<vmem>>, vector<1x1x256xf32>
    %295 = vector.shape_cast %294 : vector<1x1x256xf32> to vector<1x256xf32>
    %296 = vector.broadcast %295 : vector<1x256xf32> to vector<2x256xf32>
    %297 = arith.mulf %296, %293 : vector<2x256xf32>
    %298 = arith.addf %221, %297 : vector<2x256xf32>
    %cst_54 = arith.constant 0.000000e+00 : f32
    %299 = vector.broadcast %cst_54 : f32 to vector<2x256xf32>
    %c21 = arith.constant 21 : index
    %300 = memref.load %arg6[%c21] : memref<98xf32, #tpu.memory_space<smem>>
    %c70 = arith.constant 70 : index
    %301 = memref.load %arg6[%c70] : memref<98xf32, #tpu.memory_space<smem>>
    %302 = arith.subf %301, %300 : f32
    %303 = vector.broadcast %302 : f32 to vector<2x1xf32>
    %304 = arith.mulf %303, %32 : vector<2x1xf32>
    %305 = vector.broadcast %300 : f32 to vector<2x1xf32>
    %306 = arith.addf %305, %304 : vector<2x1xf32>
    %307 = vector.broadcast %306 : vector<2x1xf32> to vector<2x256xf32>
    %308 = arith.mulf %307, %37 : vector<2x256xf32>
    %309 = arith.addf %299, %308 : vector<2x256xf32>
    %c22 = arith.constant 22 : index
    %310 = memref.load %arg6[%c22] : memref<98xf32, #tpu.memory_space<smem>>
    %c71 = arith.constant 71 : index
    %311 = memref.load %arg6[%c71] : memref<98xf32, #tpu.memory_space<smem>>
    %312 = arith.subf %311, %310 : f32
    %313 = vector.broadcast %312 : f32 to vector<2x1xf32>
    %314 = arith.mulf %313, %32 : vector<2x1xf32>
    %315 = vector.broadcast %310 : f32 to vector<2x1xf32>
    %316 = arith.addf %315, %314 : vector<2x1xf32>
    %317 = vector.broadcast %316 : vector<2x1xf32> to vector<2x256xf32>
    %318 = arith.mulf %317, %42 : vector<2x256xf32>
    %319 = arith.addf %309, %318 : vector<2x256xf32>
    %c23 = arith.constant 23 : index
    %320 = memref.load %arg6[%c23] : memref<98xf32, #tpu.memory_space<smem>>
    %c72 = arith.constant 72 : index
    %321 = memref.load %arg6[%c72] : memref<98xf32, #tpu.memory_space<smem>>
    %322 = arith.subf %321, %320 : f32
    %323 = vector.broadcast %322 : f32 to vector<2x1xf32>
    %324 = arith.mulf %323, %32 : vector<2x1xf32>
    %325 = vector.broadcast %320 : f32 to vector<2x1xf32>
    %326 = arith.addf %325, %324 : vector<2x1xf32>
    %327 = vector.broadcast %326 : vector<2x1xf32> to vector<2x256xf32>
    %328 = arith.mulf %327, %47 : vector<2x256xf32>
    %329 = arith.addf %319, %328 : vector<2x256xf32>
    %c24 = arith.constant 24 : index
    %330 = memref.load %arg6[%c24] : memref<98xf32, #tpu.memory_space<smem>>
    %c73 = arith.constant 73 : index
    %331 = memref.load %arg6[%c73] : memref<98xf32, #tpu.memory_space<smem>>
    %332 = arith.subf %331, %330 : f32
    %333 = vector.broadcast %332 : f32 to vector<2x1xf32>
    %334 = arith.mulf %333, %32 : vector<2x1xf32>
    %335 = vector.broadcast %330 : f32 to vector<2x1xf32>
    %336 = arith.addf %335, %334 : vector<2x1xf32>
    %337 = vector.broadcast %336 : vector<2x1xf32> to vector<2x256xf32>
    %338 = arith.mulf %337, %51 : vector<2x256xf32>
    %339 = arith.addf %329, %338 : vector<2x256xf32>
    %c25 = arith.constant 25 : index
    %340 = memref.load %arg6[%c25] : memref<98xf32, #tpu.memory_space<smem>>
    %c74 = arith.constant 74 : index
    %341 = memref.load %arg6[%c74] : memref<98xf32, #tpu.memory_space<smem>>
    %342 = arith.subf %341, %340 : f32
    %343 = vector.broadcast %342 : f32 to vector<2x1xf32>
    %344 = arith.mulf %343, %32 : vector<2x1xf32>
    %345 = vector.broadcast %340 : f32 to vector<2x1xf32>
    %346 = arith.addf %345, %344 : vector<2x1xf32>
    %347 = vector.broadcast %346 : vector<2x1xf32> to vector<2x256xf32>
    %348 = arith.mulf %347, %56 : vector<2x256xf32>
    %349 = arith.addf %339, %348 : vector<2x256xf32>
    %c26 = arith.constant 26 : index
    %350 = memref.load %arg6[%c26] : memref<98xf32, #tpu.memory_space<smem>>
    %c75 = arith.constant 75 : index
    %351 = memref.load %arg6[%c75] : memref<98xf32, #tpu.memory_space<smem>>
    %352 = arith.subf %351, %350 : f32
    %353 = vector.broadcast %352 : f32 to vector<2x1xf32>
    %354 = arith.mulf %353, %32 : vector<2x1xf32>
    %355 = vector.broadcast %350 : f32 to vector<2x1xf32>
    %356 = arith.addf %355, %354 : vector<2x1xf32>
    %357 = vector.broadcast %356 : vector<2x1xf32> to vector<2x256xf32>
    %358 = arith.mulf %357, %61 : vector<2x256xf32>
    %359 = arith.addf %349, %358 : vector<2x256xf32>
    %c27 = arith.constant 27 : index
    %360 = memref.load %arg6[%c27] : memref<98xf32, #tpu.memory_space<smem>>
    %c76 = arith.constant 76 : index
    %361 = memref.load %arg6[%c76] : memref<98xf32, #tpu.memory_space<smem>>
    %362 = arith.subf %361, %360 : f32
    %363 = vector.broadcast %362 : f32 to vector<2x1xf32>
    %364 = arith.mulf %363, %32 : vector<2x1xf32>
    %365 = vector.broadcast %360 : f32 to vector<2x1xf32>
    %366 = arith.addf %365, %364 : vector<2x1xf32>
    %367 = vector.broadcast %366 : vector<2x1xf32> to vector<2x256xf32>
    %368 = arith.mulf %367, %66 : vector<2x256xf32>
    %369 = arith.addf %359, %368 : vector<2x256xf32>
    %c3_55 = arith.constant 3 : index
    %c0_56 = arith.constant 0 : index
    %c0_57 = arith.constant 0 : index
    %370 = vector.load %arg5[%c3_55, %c0_56, %c0_57] : memref<7x1x256xf32, #tpu.memory_space<vmem>>, vector<1x1x256xf32>
    %371 = vector.shape_cast %370 : vector<1x1x256xf32> to vector<1x256xf32>
    %372 = vector.broadcast %371 : vector<1x256xf32> to vector<2x256xf32>
    %373 = arith.mulf %372, %369 : vector<2x256xf32>
    %374 = arith.addf %298, %373 : vector<2x256xf32>
    %cst_58 = arith.constant 0.000000e+00 : f32
    %375 = vector.broadcast %cst_58 : f32 to vector<2x256xf32>
    %c28 = arith.constant 28 : index
    %376 = memref.load %arg6[%c28] : memref<98xf32, #tpu.memory_space<smem>>
    %c77 = arith.constant 77 : index
    %377 = memref.load %arg6[%c77] : memref<98xf32, #tpu.memory_space<smem>>
    %378 = arith.subf %377, %376 : f32
    %379 = vector.broadcast %378 : f32 to vector<2x1xf32>
    %380 = arith.mulf %379, %32 : vector<2x1xf32>
    %381 = vector.broadcast %376 : f32 to vector<2x1xf32>
    %382 = arith.addf %381, %380 : vector<2x1xf32>
    %383 = vector.broadcast %382 : vector<2x1xf32> to vector<2x256xf32>
    %384 = arith.mulf %383, %37 : vector<2x256xf32>
    %385 = arith.addf %375, %384 : vector<2x256xf32>
    %c29 = arith.constant 29 : index
    %386 = memref.load %arg6[%c29] : memref<98xf32, #tpu.memory_space<smem>>
    %c78 = arith.constant 78 : index
    %387 = memref.load %arg6[%c78] : memref<98xf32, #tpu.memory_space<smem>>
    %388 = arith.subf %387, %386 : f32
    %389 = vector.broadcast %388 : f32 to vector<2x1xf32>
    %390 = arith.mulf %389, %32 : vector<2x1xf32>
    %391 = vector.broadcast %386 : f32 to vector<2x1xf32>
    %392 = arith.addf %391, %390 : vector<2x1xf32>
    %393 = vector.broadcast %392 : vector<2x1xf32> to vector<2x256xf32>
    %394 = arith.mulf %393, %42 : vector<2x256xf32>
    %395 = arith.addf %385, %394 : vector<2x256xf32>
    %c30 = arith.constant 30 : index
    %396 = memref.load %arg6[%c30] : memref<98xf32, #tpu.memory_space<smem>>
    %c79 = arith.constant 79 : index
    %397 = memref.load %arg6[%c79] : memref<98xf32, #tpu.memory_space<smem>>
    %398 = arith.subf %397, %396 : f32
    %399 = vector.broadcast %398 : f32 to vector<2x1xf32>
    %400 = arith.mulf %399, %32 : vector<2x1xf32>
    %401 = vector.broadcast %396 : f32 to vector<2x1xf32>
    %402 = arith.addf %401, %400 : vector<2x1xf32>
    %403 = vector.broadcast %402 : vector<2x1xf32> to vector<2x256xf32>
    %404 = arith.mulf %403, %47 : vector<2x256xf32>
    %405 = arith.addf %395, %404 : vector<2x256xf32>
    %c31 = arith.constant 31 : index
    %406 = memref.load %arg6[%c31] : memref<98xf32, #tpu.memory_space<smem>>
    %c80 = arith.constant 80 : index
    %407 = memref.load %arg6[%c80] : memref<98xf32, #tpu.memory_space<smem>>
    %408 = arith.subf %407, %406 : f32
    %409 = vector.broadcast %408 : f32 to vector<2x1xf32>
    %410 = arith.mulf %409, %32 : vector<2x1xf32>
    %411 = vector.broadcast %406 : f32 to vector<2x1xf32>
    %412 = arith.addf %411, %410 : vector<2x1xf32>
    %413 = vector.broadcast %412 : vector<2x1xf32> to vector<2x256xf32>
    %414 = arith.mulf %413, %51 : vector<2x256xf32>
    %415 = arith.addf %405, %414 : vector<2x256xf32>
    %c32 = arith.constant 32 : index
    %416 = memref.load %arg6[%c32] : memref<98xf32, #tpu.memory_space<smem>>
    %c81 = arith.constant 81 : index
    %417 = memref.load %arg6[%c81] : memref<98xf32, #tpu.memory_space<smem>>
    %418 = arith.subf %417, %416 : f32
    %419 = vector.broadcast %418 : f32 to vector<2x1xf32>
    %420 = arith.mulf %419, %32 : vector<2x1xf32>
    %421 = vector.broadcast %416 : f32 to vector<2x1xf32>
    %422 = arith.addf %421, %420 : vector<2x1xf32>
    %423 = vector.broadcast %422 : vector<2x1xf32> to vector<2x256xf32>
    %424 = arith.mulf %423, %56 : vector<2x256xf32>
    %425 = arith.addf %415, %424 : vector<2x256xf32>
    %c33 = arith.constant 33 : index
    %426 = memref.load %arg6[%c33] : memref<98xf32, #tpu.memory_space<smem>>
    %c82 = arith.constant 82 : index
    %427 = memref.load %arg6[%c82] : memref<98xf32, #tpu.memory_space<smem>>
    %428 = arith.subf %427, %426 : f32
    %429 = vector.broadcast %428 : f32 to vector<2x1xf32>
    %430 = arith.mulf %429, %32 : vector<2x1xf32>
    %431 = vector.broadcast %426 : f32 to vector<2x1xf32>
    %432 = arith.addf %431, %430 : vector<2x1xf32>
    %433 = vector.broadcast %432 : vector<2x1xf32> to vector<2x256xf32>
    %434 = arith.mulf %433, %61 : vector<2x256xf32>
    %435 = arith.addf %425, %434 : vector<2x256xf32>
    %c34 = arith.constant 34 : index
    %436 = memref.load %arg6[%c34] : memref<98xf32, #tpu.memory_space<smem>>
    %c83 = arith.constant 83 : index
    %437 = memref.load %arg6[%c83] : memref<98xf32, #tpu.memory_space<smem>>
    %438 = arith.subf %437, %436 : f32
    %439 = vector.broadcast %438 : f32 to vector<2x1xf32>
    %440 = arith.mulf %439, %32 : vector<2x1xf32>
    %441 = vector.broadcast %436 : f32 to vector<2x1xf32>
    %442 = arith.addf %441, %440 : vector<2x1xf32>
    %443 = vector.broadcast %442 : vector<2x1xf32> to vector<2x256xf32>
    %444 = arith.mulf %443, %66 : vector<2x256xf32>
    %445 = arith.addf %435, %444 : vector<2x256xf32>
    %c240_i32 = arith.constant 240 : i32
    %446 = tpu.dynamic_rotate %445 by %c240_i32 dim 1 : vector<2x256xf32>, i32 -> vector<2x256xf32>
    %c4_59 = arith.constant 4 : index
    %c0_60 = arith.constant 0 : index
    %c0_61 = arith.constant 0 : index
    %447 = vector.load %arg5[%c4_59, %c0_60, %c0_61] : memref<7x1x256xf32, #tpu.memory_space<vmem>>, vector<1x1x256xf32>
    %448 = vector.shape_cast %447 : vector<1x1x256xf32> to vector<1x256xf32>
    %449 = vector.broadcast %448 : vector<1x256xf32> to vector<2x256xf32>
    %450 = arith.mulf %449, %446 : vector<2x256xf32>
    %451 = arith.addf %374, %450 : vector<2x256xf32>
    %cst_62 = arith.constant 0.000000e+00 : f32
    %452 = vector.broadcast %cst_62 : f32 to vector<2x256xf32>
    %c35 = arith.constant 35 : index
    %453 = memref.load %arg6[%c35] : memref<98xf32, #tpu.memory_space<smem>>
    %c84 = arith.constant 84 : index
    %454 = memref.load %arg6[%c84] : memref<98xf32, #tpu.memory_space<smem>>
    %455 = arith.subf %454, %453 : f32
    %456 = vector.broadcast %455 : f32 to vector<2x1xf32>
    %457 = arith.mulf %456, %32 : vector<2x1xf32>
    %458 = vector.broadcast %453 : f32 to vector<2x1xf32>
    %459 = arith.addf %458, %457 : vector<2x1xf32>
    %460 = vector.broadcast %459 : vector<2x1xf32> to vector<2x256xf32>
    %461 = arith.mulf %460, %37 : vector<2x256xf32>
    %462 = arith.addf %452, %461 : vector<2x256xf32>
    %c36 = arith.constant 36 : index
    %463 = memref.load %arg6[%c36] : memref<98xf32, #tpu.memory_space<smem>>
    %c85 = arith.constant 85 : index
    %464 = memref.load %arg6[%c85] : memref<98xf32, #tpu.memory_space<smem>>
    %465 = arith.subf %464, %463 : f32
    %466 = vector.broadcast %465 : f32 to vector<2x1xf32>
    %467 = arith.mulf %466, %32 : vector<2x1xf32>
    %468 = vector.broadcast %463 : f32 to vector<2x1xf32>
    %469 = arith.addf %468, %467 : vector<2x1xf32>
    %470 = vector.broadcast %469 : vector<2x1xf32> to vector<2x256xf32>
    %471 = arith.mulf %470, %42 : vector<2x256xf32>
    %472 = arith.addf %462, %471 : vector<2x256xf32>
    %c37 = arith.constant 37 : index
    %473 = memref.load %arg6[%c37] : memref<98xf32, #tpu.memory_space<smem>>
    %c86 = arith.constant 86 : index
    %474 = memref.load %arg6[%c86] : memref<98xf32, #tpu.memory_space<smem>>
    %475 = arith.subf %474, %473 : f32
    %476 = vector.broadcast %475 : f32 to vector<2x1xf32>
    %477 = arith.mulf %476, %32 : vector<2x1xf32>
    %478 = vector.broadcast %473 : f32 to vector<2x1xf32>
    %479 = arith.addf %478, %477 : vector<2x1xf32>
    %480 = vector.broadcast %479 : vector<2x1xf32> to vector<2x256xf32>
    %481 = arith.mulf %480, %47 : vector<2x256xf32>
    %482 = arith.addf %472, %481 : vector<2x256xf32>
    %c38 = arith.constant 38 : index
    %483 = memref.load %arg6[%c38] : memref<98xf32, #tpu.memory_space<smem>>
    %c87 = arith.constant 87 : index
    %484 = memref.load %arg6[%c87] : memref<98xf32, #tpu.memory_space<smem>>
    %485 = arith.subf %484, %483 : f32
    %486 = vector.broadcast %485 : f32 to vector<2x1xf32>
    %487 = arith.mulf %486, %32 : vector<2x1xf32>
    %488 = vector.broadcast %483 : f32 to vector<2x1xf32>
    %489 = arith.addf %488, %487 : vector<2x1xf32>
    %490 = vector.broadcast %489 : vector<2x1xf32> to vector<2x256xf32>
    %491 = arith.mulf %490, %51 : vector<2x256xf32>
    %492 = arith.addf %482, %491 : vector<2x256xf32>
    %c39 = arith.constant 39 : index
    %493 = memref.load %arg6[%c39] : memref<98xf32, #tpu.memory_space<smem>>
    %c88 = arith.constant 88 : index
    %494 = memref.load %arg6[%c88] : memref<98xf32, #tpu.memory_space<smem>>
    %495 = arith.subf %494, %493 : f32
    %496 = vector.broadcast %495 : f32 to vector<2x1xf32>
    %497 = arith.mulf %496, %32 : vector<2x1xf32>
    %498 = vector.broadcast %493 : f32 to vector<2x1xf32>
    %499 = arith.addf %498, %497 : vector<2x1xf32>
    %500 = vector.broadcast %499 : vector<2x1xf32> to vector<2x256xf32>
    %501 = arith.mulf %500, %56 : vector<2x256xf32>
    %502 = arith.addf %492, %501 : vector<2x256xf32>
    %c40 = arith.constant 40 : index
    %503 = memref.load %arg6[%c40] : memref<98xf32, #tpu.memory_space<smem>>
    %c89 = arith.constant 89 : index
    %504 = memref.load %arg6[%c89] : memref<98xf32, #tpu.memory_space<smem>>
    %505 = arith.subf %504, %503 : f32
    %506 = vector.broadcast %505 : f32 to vector<2x1xf32>
    %507 = arith.mulf %506, %32 : vector<2x1xf32>
    %508 = vector.broadcast %503 : f32 to vector<2x1xf32>
    %509 = arith.addf %508, %507 : vector<2x1xf32>
    %510 = vector.broadcast %509 : vector<2x1xf32> to vector<2x256xf32>
    %511 = arith.mulf %510, %61 : vector<2x256xf32>
    %512 = arith.addf %502, %511 : vector<2x256xf32>
    %c41 = arith.constant 41 : index
    %513 = memref.load %arg6[%c41] : memref<98xf32, #tpu.memory_space<smem>>
    %c90 = arith.constant 90 : index
    %514 = memref.load %arg6[%c90] : memref<98xf32, #tpu.memory_space<smem>>
    %515 = arith.subf %514, %513 : f32
    %516 = vector.broadcast %515 : f32 to vector<2x1xf32>
    %517 = arith.mulf %516, %32 : vector<2x1xf32>
    %518 = vector.broadcast %513 : f32 to vector<2x1xf32>
    %519 = arith.addf %518, %517 : vector<2x1xf32>
    %520 = vector.broadcast %519 : vector<2x1xf32> to vector<2x256xf32>
    %521 = arith.mulf %520, %66 : vector<2x256xf32>
    %522 = arith.addf %512, %521 : vector<2x256xf32>
    %c224_i32 = arith.constant 224 : i32
    %523 = tpu.dynamic_rotate %522 by %c224_i32 dim 1 : vector<2x256xf32>, i32 -> vector<2x256xf32>
    %c5_63 = arith.constant 5 : index
    %c0_64 = arith.constant 0 : index
    %c0_65 = arith.constant 0 : index
    %524 = vector.load %arg5[%c5_63, %c0_64, %c0_65] : memref<7x1x256xf32, #tpu.memory_space<vmem>>, vector<1x1x256xf32>
    %525 = vector.shape_cast %524 : vector<1x1x256xf32> to vector<1x256xf32>
    %526 = vector.broadcast %525 : vector<1x256xf32> to vector<2x256xf32>
    %527 = arith.mulf %526, %523 : vector<2x256xf32>
    %528 = arith.addf %451, %527 : vector<2x256xf32>
    %cst_66 = arith.constant 0.000000e+00 : f32
    %529 = vector.broadcast %cst_66 : f32 to vector<2x256xf32>
    %c42 = arith.constant 42 : index
    %530 = memref.load %arg6[%c42] : memref<98xf32, #tpu.memory_space<smem>>
    %c91 = arith.constant 91 : index
    %531 = memref.load %arg6[%c91] : memref<98xf32, #tpu.memory_space<smem>>
    %532 = arith.subf %531, %530 : f32
    %533 = vector.broadcast %532 : f32 to vector<2x1xf32>
    %534 = arith.mulf %533, %32 : vector<2x1xf32>
    %535 = vector.broadcast %530 : f32 to vector<2x1xf32>
    %536 = arith.addf %535, %534 : vector<2x1xf32>
    %537 = vector.broadcast %536 : vector<2x1xf32> to vector<2x256xf32>
    %538 = arith.mulf %537, %37 : vector<2x256xf32>
    %539 = arith.addf %529, %538 : vector<2x256xf32>
    %c43 = arith.constant 43 : index
    %540 = memref.load %arg6[%c43] : memref<98xf32, #tpu.memory_space<smem>>
    %c92 = arith.constant 92 : index
    %541 = memref.load %arg6[%c92] : memref<98xf32, #tpu.memory_space<smem>>
    %542 = arith.subf %541, %540 : f32
    %543 = vector.broadcast %542 : f32 to vector<2x1xf32>
    %544 = arith.mulf %543, %32 : vector<2x1xf32>
    %545 = vector.broadcast %540 : f32 to vector<2x1xf32>
    %546 = arith.addf %545, %544 : vector<2x1xf32>
    %547 = vector.broadcast %546 : vector<2x1xf32> to vector<2x256xf32>
    %548 = arith.mulf %547, %42 : vector<2x256xf32>
    %549 = arith.addf %539, %548 : vector<2x256xf32>
    %c44 = arith.constant 44 : index
    %550 = memref.load %arg6[%c44] : memref<98xf32, #tpu.memory_space<smem>>
    %c93 = arith.constant 93 : index
    %551 = memref.load %arg6[%c93] : memref<98xf32, #tpu.memory_space<smem>>
    %552 = arith.subf %551, %550 : f32
    %553 = vector.broadcast %552 : f32 to vector<2x1xf32>
    %554 = arith.mulf %553, %32 : vector<2x1xf32>
    %555 = vector.broadcast %550 : f32 to vector<2x1xf32>
    %556 = arith.addf %555, %554 : vector<2x1xf32>
    %557 = vector.broadcast %556 : vector<2x1xf32> to vector<2x256xf32>
    %558 = arith.mulf %557, %47 : vector<2x256xf32>
    %559 = arith.addf %549, %558 : vector<2x256xf32>
    %c45 = arith.constant 45 : index
    %560 = memref.load %arg6[%c45] : memref<98xf32, #tpu.memory_space<smem>>
    %c94 = arith.constant 94 : index
    %561 = memref.load %arg6[%c94] : memref<98xf32, #tpu.memory_space<smem>>
    %562 = arith.subf %561, %560 : f32
    %563 = vector.broadcast %562 : f32 to vector<2x1xf32>
    %564 = arith.mulf %563, %32 : vector<2x1xf32>
    %565 = vector.broadcast %560 : f32 to vector<2x1xf32>
    %566 = arith.addf %565, %564 : vector<2x1xf32>
    %567 = vector.broadcast %566 : vector<2x1xf32> to vector<2x256xf32>
    %568 = arith.mulf %567, %51 : vector<2x256xf32>
    %569 = arith.addf %559, %568 : vector<2x256xf32>
    %c46 = arith.constant 46 : index
    %570 = memref.load %arg6[%c46] : memref<98xf32, #tpu.memory_space<smem>>
    %c95 = arith.constant 95 : index
    %571 = memref.load %arg6[%c95] : memref<98xf32, #tpu.memory_space<smem>>
    %572 = arith.subf %571, %570 : f32
    %573 = vector.broadcast %572 : f32 to vector<2x1xf32>
    %574 = arith.mulf %573, %32 : vector<2x1xf32>
    %575 = vector.broadcast %570 : f32 to vector<2x1xf32>
    %576 = arith.addf %575, %574 : vector<2x1xf32>
    %577 = vector.broadcast %576 : vector<2x1xf32> to vector<2x256xf32>
    %578 = arith.mulf %577, %56 : vector<2x256xf32>
    %579 = arith.addf %569, %578 : vector<2x256xf32>
    %c47 = arith.constant 47 : index
    %580 = memref.load %arg6[%c47] : memref<98xf32, #tpu.memory_space<smem>>
    %c96 = arith.constant 96 : index
    %581 = memref.load %arg6[%c96] : memref<98xf32, #tpu.memory_space<smem>>
    %582 = arith.subf %581, %580 : f32
    %583 = vector.broadcast %582 : f32 to vector<2x1xf32>
    %584 = arith.mulf %583, %32 : vector<2x1xf32>
    %585 = vector.broadcast %580 : f32 to vector<2x1xf32>
    %586 = arith.addf %585, %584 : vector<2x1xf32>
    %587 = vector.broadcast %586 : vector<2x1xf32> to vector<2x256xf32>
    %588 = arith.mulf %587, %61 : vector<2x256xf32>
    %589 = arith.addf %579, %588 : vector<2x256xf32>
    %c48 = arith.constant 48 : index
    %590 = memref.load %arg6[%c48] : memref<98xf32, #tpu.memory_space<smem>>
    %c97 = arith.constant 97 : index
    %591 = memref.load %arg6[%c97] : memref<98xf32, #tpu.memory_space<smem>>
    %592 = arith.subf %591, %590 : f32
    %593 = vector.broadcast %592 : f32 to vector<2x1xf32>
    %594 = arith.mulf %593, %32 : vector<2x1xf32>
    %595 = vector.broadcast %590 : f32 to vector<2x1xf32>
    %596 = arith.addf %595, %594 : vector<2x1xf32>
    %597 = vector.broadcast %596 : vector<2x1xf32> to vector<2x256xf32>
    %598 = arith.mulf %597, %66 : vector<2x256xf32>
    %599 = arith.addf %589, %598 : vector<2x256xf32>
    %c208_i32 = arith.constant 208 : i32
    %600 = tpu.dynamic_rotate %599 by %c208_i32 dim 1 : vector<2x256xf32>, i32 -> vector<2x256xf32>
    %c6_67 = arith.constant 6 : index
    %c0_68 = arith.constant 0 : index
    %c0_69 = arith.constant 0 : index
    %601 = vector.load %arg5[%c6_67, %c0_68, %c0_69] : memref<7x1x256xf32, #tpu.memory_space<vmem>>, vector<1x1x256xf32>
    %602 = vector.shape_cast %601 : vector<1x1x256xf32> to vector<1x256xf32>
    %603 = vector.broadcast %602 : vector<1x256xf32> to vector<2x256xf32>
    %604 = arith.mulf %603, %600 : vector<2x256xf32>
    %605 = arith.addf %528, %604 : vector<2x256xf32>
    %606 = vector.extract_strided_slice %605 {offsets = [0, 0], sizes = [1, 256], strides = [1, 1]} : vector<2x256xf32> to vector<1x256xf32>
    %607 = vector.extract_strided_slice %605 {offsets = [1, 0], sizes = [1, 256], strides = [1, 1]} : vector<2x256xf32> to vector<1x256xf32>
    %608 = arith.addf %606, %607 : vector<1x256xf32>
    %cst_70 = arith.constant 5.000000e-01 : f32
    %609 = vector.broadcast %cst_70 : f32 to vector<1x256xf32>
    %610 = arith.mulf %609, %608 : vector<1x256xf32>
    %611 = math.tanh %610 : vector<1x256xf32>
    %cst_71 = arith.constant 1.000000e+00 : f32
    %612 = vector.broadcast %cst_71 : f32 to vector<1x256xf32>
    %613 = arith.addf %611, %612 : vector<1x256xf32>
    %cst_72 = arith.constant 5.000000e-01 : f32
    %614 = vector.broadcast %cst_72 : f32 to vector<1x256xf32>
    %615 = arith.mulf %614, %613 : vector<1x256xf32>
    %616 = vector.shape_cast %615 : vector<1x256xf32> to vector<1x1x256xf32>
    %617 = vector.broadcast %616 : vector<1x1x256xf32> to vector<1x16x256xf32>
    %618 = arith.mulf %24, %617 : vector<1x16x256xf32>
    %c0_73 = arith.constant 0 : index
    %c0_74 = arith.constant 0 : index
    %c0_75 = arith.constant 0 : index
    %619 = vector.load %arg7[%c0_73, %c0_74, %c0_75] : memref<1x16x256xf32, #tpu.memory_space<vmem>>, vector<1x16x256xf32>
    tpu.vector_store %arg7[%c0_73, %c0_74, %c0_75], %618 {strides = array<i32>} : memref<1x16x256xf32, #tpu.memory_space<vmem>>, vector<1x16x256xf32>,
    return
  }
  func.func @transform_0(%arg0: i32) -> (i32, i32, i32) {
    %c0_i32 = arith.constant 0 : i32
    %c0_i32_0 = arith.constant 0 : i32
    %c0_i32_1 = arith.constant 0 : i32
    return %arg0, %c0_i32, %c0_i32_0 : i32, i32, i32
  }
  func.func @transform_1(%arg0: i32) -> (i32, i32) {
    %c0_i32 = arith.constant 0 : i32
    %c0_i32_0 = arith.constant 0 : i32
    %c0_i32_1 = arith.constant 0 : i32
    return %c0_i32, %c0_i32_0 : i32, i32
  }
  func.func @transform_2(%arg0: i32) -> (i32, i32) {
    %c0_i32 = arith.constant 0 : i32
    %c0_i32_0 = arith.constant 0 : i32
    %c0_i32_1 = arith.constant 0 : i32
    return %c0_i32, %c0_i32_0 : i32, i32
  }
  func.func @transform_3(%arg0: i32) -> (i32, i32, i32) {
    %c0_i32 = arith.constant 0 : i32
    %c0_i32_0 = arith.constant 0 : i32
    %c0_i32_1 = arith.constant 0 : i32
    %c0_i32_2 = arith.constant 0 : i32
    return %c0_i32, %c0_i32_0, %c0_i32_1 : i32, i32, i32
  }
  func.func @transform_4(%arg0: i32) -> (i32, i32, i32) {
    %c0_i32 = arith.constant 0 : i32
    %c0_i32_0 = arith.constant 0 : i32
    %c0_i32_1 = arith.constant 0 : i32
    %c0_i32_2 = arith.constant 0 : i32
    return %c0_i32, %c0_i32_0, %c0_i32_1 : i32, i32, i32
  }
  func.func @transform_5(%arg0: i32) -> i32 {
    %c0_i32 = arith.constant 0 : i32
    %c0_i32_0 = arith.constant 0 : i32
    return %c0_i32 : i32
  }
  func.func @transform_6(%arg0: i32) -> (i32, i32, i32) {
    %c0_i32 = arith.constant 0 : i32
    %c0_i32_0 = arith.constant 0 : i32
    %c0_i32_1 = arith.constant 0 : i32
    return %arg0, %c0_i32, %c0_i32_0 : i32, i32, i32
  }
}

</mosaic_0001>

<llo_original>
// kernel: tpu_custom_call.1
$region0: #{tpu_custom_call.1}
  #allocation0 [shape = 'u32[]', space=smem, size = 0x4, offset = 0x4, fixed_abs, tag = 'smem constant byte address 0x4 - core index']
  #allocation1 [shape = 'u32[72,128]{1,0:T(1,128)}', space=vmem, size = 0x9000, scoped, tag = 'internal scratch']
  %s0 = inlined_call_operand.hbm [shape: f32[2,16,256], index: 0, kind: input, shape index: {}]
  %s1 = inlined_call_operand.vmem [shape: f32[16,2], index: 1, kind: input, shape index: {}]
  %s2 = inlined_call_operand.vmem [shape: f32[2,16], index: 2, kind: input, shape index: {}]
  %s3 = inlined_call_operand.vmem [shape: f32[7,1,256], index: 3, kind: input, shape index: {}]
  %s4 = inlined_call_operand.hbm [shape: f32[7,1,256], index: 4, kind: input, shape index: {}]
  %s5 = inlined_call_operand.vmem [shape: f32[98], index: 5, kind: input, shape index: {}]
  %s6 = inlined_call_operand.hbm [shape: f32[2,16,256], index: 6, kind: output, shape index: {}]
  %s7 = sld [smem:[#allocation0]]
  $region69: #{tpu_custom_call.1} parent=0
    _
  %s9 = ssub.s32 1, %s7
  %s10 = scalar_select 0, %s9, %s7
  $region1: #{tpu_custom_call.1} parent=0
    #allocation2 [shape = 'u8[32768]{0}', space=vmem, size = 0x8000, scoped, tag = 'input window, operand 0']
    #allocation3 [shape = 's32[2]{0}', space=sflag, size = 0x8, scoped, tag = 'scoped memory for tpu_custom_call.1']
    #allocation4 [shape = 's32[2]{0}', space=sflag, size = 0x8, scoped, tag = 'scoped memory for tpu_custom_call.1']
    #allocation5 [shape = 's32[2]{0}', space=sflag, size = 0x8, scoped, tag = 'scoped memory for tpu_custom_call.1']
    #allocation6 [shape = 'u8[7168]{0}', space=vmem, size = 0x1c00, scoped, tag = 'input window, operand 4, single buffered']
    #allocation7 [shape = 's32[1]{0}', space=sflag, size = 0x4, scoped, tag = 'scoped memory for tpu_custom_call.1']
    #allocation8 [shape = 'u8[512]{0}', space=smem, size = 0x200, scoped, tag = 'input window, operand 5, single buffered']
    #allocation9 [shape = 'u8[32768]{0}', space=vmem, size = 0x8000, scoped, tag = 'output window, operand 0']
    %11 = vsyncpa [#allocation3], 0
    %s12 = scalar_lea.sflag [#allocation3], 1
    %13 = vsyncpa %s12, 0
    %14 = vsyncpa [#allocation7], 0
    %15 = vsyncpa [#allocation5], 0
    %16 = vsyncpa [#allocation4], 0
    %s17 = scalar_lea.sflag [#allocation4], 1
    %18 = vsyncpa %s17, 0
    loop: start=0, step=1, limit=4
    $region2: #{tpu_custom_call.1} parent=1 // loop_pre_header
      _
    $region3: #{tpu_custom_call.1} parent=1 // loop_header
      %s20 = sphi 0, %s24
      %p21 = scmp.ge.s32.totalorder %s20, 4
      %s30 = sphi 0, %s32
      %s33 = sphi 0, %s30
      %s34 = sphi 0, %s33
      %s50 = sphi 0, %s34
      %s54 = sphi 0, %s54
      %s56 = sphi 0, %s54
      %s57 = sphi 0, %s56
      %s71 = sphi 0, %s57
      %s75 = sphi 0, %s75
      %s77 = sphi 0, %s75
      %s78 = sphi 0, %s77
      %s92 = sphi 0, %s78
      %s96 = sphi 0, %s96
      %s98 = sphi 0, %s96
      %s99 = sphi 0, %s98
      %s113 = sphi 0, %s99
      %s117 = sphi 0, %s117
      %s119 = sphi 0, %s117
      %s120 = sphi 0, %s119
      %s134 = sphi 0, %s120
      %s138 = sphi 0, %s138
      %s140 = sphi 0, %s138
      %s141 = sphi 0, %s140
      %s155 = sphi 0, %s141
      %s161 = sphi 0, %s163
      %s164 = sphi 0, %s161
      %s165 = sphi 0, %s164
      %s181 = sphi 0, %s165
    $region4: #{tpu_custom_call.1} parent=1 // loop_header_branch
      %23 = sbr.rel (%p21) target = $region8
    $region5: #{tpu_custom_call.1} parent=1 // loop_body
      %s25 = ssub.s32 %s20, 1
      %s26 = ssub.s32 %s20, 2
      %s27 = sadd.s32 %s20, 1
      %s28 = ssub.s32 %s20, %s27
      %p29 = scmp.eq.s32.totalorder %s28, 0
      %s31 = sadd.s32 %s30, 1
      %s32 = scalar_select %p29, %s30, %s31
      %p35 = pneg %p29
      %p36 = scmp.eq.s32.totalorder %s20, 1
      %p37 = por %p35, %p36
      %p38 = scmp.ne.s32.totalorder %s30, %s33
      %p39 = scmp.eq.s32.totalorder %s20, 0
      %p40 = por %p38, %p39
      %p41 = scmp.ne.s32.totalorder %s30, %s33
      %p42 = scmp.eq.s32.totalorder %s25, 1
      %p43 = por %p41, %p42
      %p44 = scmp.ne.s32.totalorder %s33, %s34
      %p45 = scmp.eq.s32.totalorder %s25, 0
      %p46 = por %p44, %p45
      %p47 = scmp.ne.s32.totalorder %s33, %s34
      %p48 = scmp.eq.s32.totalorder %s26, 1
      %p49 = por %p47, %p48
      %p51 = scmp.ne.s32.totalorder %s34, %s50
      %p52 = scmp.eq.s32.totalorder %s26, 0
      %p53 = por %p51, %p52
      %s55 = sadd.s32 %s54, 1
      %p58 = scmp.eq.s32.totalorder %s20, 1
      %p59 = scmp.ne.s32.totalorder %s54, %s56
      %p60 = scmp.eq.s32.totalorder %s20, 0
      %p61 = por %p59, %p60
      %p62 = scmp.ne.s32.totalorder %s54, %s56
      %p63 = scmp.eq.s32.totalorder %s25, 1
      %p64 = por %p62, %p63
      %p65 = scmp.ne.s32.totalorder %s56, %s57
      %p66 = scmp.eq.s32.totalorder %s25, 0
      %p67 = por %p65, %p66
      %p68 = scmp.ne.s32.totalorder %s56, %s57
      %p69 = scmp.eq.s32.totalorder %s26, 1
      %p70 = por %p68, %p69
      %p72 = scmp.ne.s32.totalorder %s57, %s71
      %p73 = scmp.eq.s32.totalorder %s26, 0
      %p74 = por %p72, %p73
      %s76 = sadd.s32 %s75, 1
      %p79 = scmp.eq.s32.totalorder %s20, 1
      %p80 = scmp.ne.s32.totalorder %s75, %s77
      %p81 = scmp.eq.s32.totalorder %s20, 0
      %p82 = por %p80, %p81
      %p83 = scmp.ne.s32.totalorder %s75, %s77
      %p84 = scmp.eq.s32.totalorder %s25, 1
      %p85 = por %p83, %p84
      %p86 = scmp.ne.s32.totalorder %s77, %s78
      %p87 = scmp.eq.s32.totalorder %s25, 0
      %p88 = por %p86, %p87
      %p89 = scmp.ne.s32.totalorder %s77, %s78
      %p90 = scmp.eq.s32.totalorder %s26, 1
      %p91 = por %p89, %p90
      %p93 = scmp.ne.s32.totalorder %s78, %s92
      %p94 = scmp.eq.s32.totalorder %s26, 0
      %p95 = por %p93, %p94
      %s97 = sadd.s32 %s96, 1
      %p100 = scmp.eq.s32.totalorder %s20, 1
      %p101 = scmp.ne.s32.totalorder %s96, %s98
      %p102 = scmp.eq.s32.totalorder %s20, 0
      %p103 = por %p101, %p102
      %p104 = scmp.ne.s32.totalorder %s96, %s98
      %p105 = scmp.eq.s32.totalorder %s25, 1
      %p106 = por %p104, %p105
      %p107 = scmp.ne.s32.totalorder %s98, %s99
      %p108 = scmp.eq.s32.totalorder %s25, 0
      %p109 = por %p107, %p108
      %p110 = scmp.ne.s32.totalorder %s98, %s99
      %p111 = scmp.eq.s32.totalorder %s26, 1
      %p112 = por %p110, %p111
      %p114 = scmp.ne.s32.totalorder %s99, %s113
      %p115 = scmp.eq.s32.totalorder %s26, 0
      %p116 = por %p114, %p115
      %s118 = sadd.s32 %s117, 1
      %p121 = scmp.eq.s32.totalorder %s20, 1
      %p122 = scmp.ne.s32.totalorder %s117, %s119
      %p123 = scmp.eq.s32.totalorder %s20, 0
      %p124 = por %p122, %p123
      %p125 = scmp.ne.s32.totalorder %s117, %s119
      %p126 = scmp.eq.s32.totalorder %s25, 1
      %p127 = por %p125, %p126
      %p128 = scmp.ne.s32.totalorder %s119, %s120
      %p129 = scmp.eq.s32.totalorder %s25, 0
      %p130 = por %p128, %p129
      %p131 = scmp.ne.s32.totalorder %s119, %s120
      %p132 = scmp.eq.s32.totalorder %s26, 1
      %p133 = por %p131, %p132
      %p135 = scmp.ne.s32.totalorder %s120, %s134
      %p136 = scmp.eq.s32.totalorder %s26, 0
      %p137 = por %p135, %p136
      %s139 = sadd.s32 %s138, 1
      %p142 = scmp.eq.s32.totalorder %s20, 1
      %p143 = scmp.ne.s32.totalorder %s138, %s140
      %p144 = scmp.eq.s32.totalorder %s20, 0
      %p145 = por %p143, %p144
      %p146 = scmp.ne.s32.totalorder %s138, %s140
      %p147 = scmp.eq.s32.totalorder %s25, 1
      %p148 = por %p146, %p147
      %p149 = scmp.ne.s32.totalorder %s140, %s141
      %p150 = scmp.eq.s32.totalorder %s25, 0
      %p151 = por %p149, %p150
      %p152 = scmp.ne.s32.totalorder %s140, %s141
      %p153 = scmp.eq.s32.totalorder %s26, 1
      %p154 = por %p152, %p153
      %p156 = scmp.ne.s32.totalorder %s141, %s155
      %p157 = scmp.eq.s32.totalorder %s26, 0
      %p158 = por %p156, %p157
      %s159 = ssub.s32 %s20, %s27
      %p160 = scmp.eq.s32.totalorder %s159, 0
      %s162 = sadd.s32 %s161, 1
      %s163 = scalar_select %p160, %s161, %s162
      %p166 = pneg %p160
      %p167 = scmp.eq.s32.totalorder %s20, 1
      %p168 = por %p166, %p167
      %p169 = scmp.ne.s32.totalorder %s161, %s164
      %p170 = scmp.eq.s32.totalorder %s20, 0
      %p171 = por %p169, %p170
      %p172 = scmp.ne.s32.totalorder %s161, %s164
      %p173 = scmp.eq.s32.totalorder %s25, 1
      %p174 = por %p172, %p173
      %p175 = scmp.ne.s32.totalorder %s164, %s165
      %p176 = scmp.eq.s32.totalorder %s25, 0
      %p177 = por %p175, %p176
      %p178 = scmp.ne.s32.totalorder %s164, %s165
      %p179 = scmp.eq.s32.totalorder %s26, 1
      %p180 = por %p178, %p179
      %p182 = scmp.ne.s32.totalorder %s165, %s181
      %p183 = scmp.eq.s32.totalorder %s26, 0
      %p184 = por %p182, %p183
      %p185 = scmp.le.s32.totalorder 1, %s20
      %p186 = scmp.lt.s32.totalorder %s20, 3
      %p187 = pnand %p185, %p186
      %p188 = pneg %p187
      // Predicated region
      $region9: #{tpu_custom_call.1} parent=5 // pred_check
        _
      $region10: #{tpu_custom_call.1} parent=5 // pred_check_branch
        %190 = sbr.rel (%p187) target = $region12
      $region11: #{tpu_custom_call.1} parent=5 // pred_region
        %s191 = ssub.s32 %s20, 1
        // Predicated region
        $region13: #{tpu_custom_call.1} parent=11 // pred_check
          %p192 = pneg %p67
        $region14: #{tpu_custom_call.1} parent=11 // pred_check_branch
          %194 = sbr.rel (%p192) target = $region16
        $region15: #{tpu_custom_call.1} parent=11 // pred_region
          _
        $region16: #{tpu_custom_call.1} parent=11 // pred_fallthru
          _
        // Predicated region
        $region17: #{tpu_custom_call.1} parent=11 // pred_check
          %p195 = pneg %p88
        $region18: #{tpu_custom_call.1} parent=11 // pred_check_branch
          %197 = sbr.rel (%p195) target = $region20
        $region19: #{tpu_custom_call.1} parent=11 // pred_region
          _
        $region20: #{tpu_custom_call.1} parent=11 // pred_fallthru
          _
        // Predicated region
        $region21: #{tpu_custom_call.1} parent=11 // pred_check
          %p198 = pneg %p109
        $region22: #{tpu_custom_call.1} parent=11 // pred_check_branch
          %200 = sbr.rel (%p198) target = $region24
        $region23: #{tpu_custom_call.1} parent=11 // pred_region
          _
        $region24: #{tpu_custom_call.1} parent=11 // pred_fallthru
          _
        // Predicated region
        $region25: #{tpu_custom_call.1} parent=11 // pred_check
          %p201 = pneg %p130
        $region26: #{tpu_custom_call.1} parent=11 // pred_check_branch
          %203 = sbr.rel (%p201) target = $region28
        $region27: #{tpu_custom_call.1} parent=11 // pred_region
          %205 = vsyncadd [#allocation7], 0
          %s206 = sshll.u32 %s4, 4
          %s207 = int_to_ptr.hbm [resolvable:$true] %s206
          %s208 = sshll.u32 [#allocation6], 4
          %s209 = int_to_ptr.vmem [resolvable:$true] %s208
          %214 = dma.hbm_to_vmem [thread:$0]  %s207, 224, %s209, [#allocation7], 32, 32, 2
        $region28: #{tpu_custom_call.1} parent=11 // pred_fallthru
          _
        // Predicated region
        $region29: #{tpu_custom_call.1} parent=11 // pred_check
          %p215 = pneg %p151
        $region30: #{tpu_custom_call.1} parent=11 // pred_check_branch
          %217 = sbr.rel (%p215) target = $region32
        $region31: #{tpu_custom_call.1} parent=11 // pred_region
          %219 = vsyncadd [#allocation5], 0
          %s221 = sshll.u32 %s5, 4
          %s222 = int_to_ptr.vmem [resolvable:$true] %s221
          %224 = dma.vmem_to_smem %s222, 16, [#allocation8], [#allocation5]
        $region32: #{tpu_custom_call.1} parent=11 // pred_fallthru
          _
      $region12: #{tpu_custom_call.1} parent=5 // pred_fallthru
        _
      %p225 = scmp.lt.s32.totalorder %s20, 2
      // Predicated region
      $region33: #{tpu_custom_call.1} parent=5 // pred_check
        %p226 = pneg %p225
      $region34: #{tpu_custom_call.1} parent=5 // pred_check_branch
        %228 = sbr.rel (%p226) target = $region36
      $region35: #{tpu_custom_call.1} parent=5 // pred_region
        // Predicated region
        $region37: #{tpu_custom_call.1} parent=35 // pred_check
          %p229 = pneg %p40
        $region38: #{tpu_custom_call.1} parent=35 // pred_check_branch
          %231 = sbr.rel (%p229) target = $region40
        $region39: #{tpu_custom_call.1} parent=35 // pred_region
          %s232 = sand.u32 %s30, 1
          %s233 = scalar_lea.sflag [#allocation3], %s232
          %s234 = sand.u32 %s30, 1
          %s235 = smul.addr %s234, 32
          %s236 = scalar_lea.vmem [#allocation2], %s235
          %238 = vsyncadd %s233, 0
          %s239 = smul.addr %s20, 4
          %s240 = smul.addr %s239, 8
          %s241 = scalar_lea.hbm %s0, %s240
          %s242 = sshll.u32 %s241, 4
          %s243 = int_to_ptr.hbm [resolvable:$true] %s242
          %s244 = sshll.u32 %s236, 4
          %s245 = int_to_ptr.vmem [resolvable:$true] %s244
          %250 = dma.hbm_to_vmem [thread:$0]  %s243, 512, %s245, %s233, 256, 256, 16
        $region40: #{tpu_custom_call.1} parent=35 // pred_fallthru
          _
      $region36: #{tpu_custom_call.1} parent=5 // pred_fallthru
        _
      %p251 = scmp.le.s32.totalorder 1, %s20
      %p252 = scmp.lt.s32.totalorder %s20, 3
      %p253 = pnand %p251, %p252
      %p254 = pneg %p253
      // Predicated region
      $region41: #{tpu_custom_call.1} parent=5 // pred_check
        _
      $region42: #{tpu_custom_call.1} parent=5 // pred_check_branch
        %256 = sbr.rel (%p253) target = $region44
      $region43: #{tpu_custom_call.1} parent=5 // pred_region
        %s257 = ssub.s32 %s20, 1
        %s258 = sand.u32 %s33, 1
        %s259 = scalar_lea.sflag [#allocation3], %s258
        %s260 = sand.u32 %s33, 1
        %s261 = smul.addr %s260, 32
        %s262 = scalar_lea.vmem [#allocation2], %s261
        // Predicated region
        $region45: #{tpu_custom_call.1} parent=43 // pred_check
          %p263 = pneg %p46
        $region46: #{tpu_custom_call.1} parent=43 // pred_check_branch
          %265 = sbr.rel (%p263) target = $region48
        $region47: #{tpu_custom_call.1} parent=43 // pred_region
          %267 = dma.done %s259, 512
        $region48: #{tpu_custom_call.1} parent=43 // pred_fallthru
          _
        // Predicated region
        $region49: #{tpu_custom_call.1} parent=43 // pred_check
          %p268 = pneg %p130
        $region50: #{tpu_custom_call.1} parent=43 // pred_check_branch
          %270 = sbr.rel (%p268) target = $region52
        $region51: #{tpu_custom_call.1} parent=43 // pred_region
          %272 = dma.done [#allocation7], 224
        $region52: #{tpu_custom_call.1} parent=43 // pred_fallthru
          _
        // Predicated region
        $region53: #{tpu_custom_call.1} parent=43 // pred_check
          %p273 = pneg %p151
        $region54: #{tpu_custom_call.1} parent=43 // pred_check_branch
          %275 = sbr.rel (%p273) target = $region56
        $region55: #{tpu_custom_call.1} parent=43 // pred_region
          %277 = dma.done [#allocation5], 16
        $region56: #{tpu_custom_call.1} parent=43 // pred_fallthru
          _
        %278 = sfence
        %s279 = sand.u32 %s33, 1
        %s280 = scalar_lea.sflag [#allocation3], %s279
        %s281 = sand.u32 %s33, 1
        %s282 = smul.addr %s281, 32
        %s283 = scalar_lea.vmem [#allocation2], %s282
        %p284 = pneg %p46
        %p285 = pneg %p43
        %p286 = pneg %p67
        %p287 = pneg %p64
        %p288 = pneg %p88
        %p289 = pneg %p85
        %p290 = pneg %p109
        %p291 = pneg %p106
        %p292 = pneg %p130
        %p293 = pneg %p127
        %p294 = pneg %p151
        %p295 = pneg %p148
        %p296 = pneg %p177
        %p297 = pneg %p174
        %s298 = sand.u32 %s164, 1
        %s299 = scalar_lea.sflag [#allocation4], %s298
        %s300 = sand.u32 %s164, 1
        %s301 = smul.addr %s300, 32
        %s302 = scalar_lea.vmem [#allocation9], %s301
        %v303 = vld [vmem:[%s262] sm:$0xff]
        %v304 = vld [vmem:[%s262 + $0x8] sm:$0xff]
        %v305 = vld [vmem:[%s262 + $0x10] sm:$0xff]
        %v306 = vld [vmem:[%s262 + $0x18] sm:$0xff]
        %v307 = vadd.f32 %v303, %v304
        %308 = vadd.xlane.f32.xlu0 %v307
        %v309 = vpop.xlane.xlu0 %308
        %v310 = vadd.f32 %v305, %v306
        %311 = vadd.xlane.f32.xlu0 %v310
        %v312 = vpop.xlane.xlu0 %311
        %v313 = vrcp.pop 256.0
        %v314 = vmul.f32 256.0, %v313
        %v315 = vsub.f32 1.0, %v314
        %v316 = vmul.f32 %v313, %v315
        %v317 = vadd.f32 %v313, %v316
        %vm318 = vweird.f32 %v313
        %v319 = vsel %vm318, %v313, %v317
        %v320 = vmul.f32 %v309, %v319
        %v321 = vmul.f32 %v312, %v319
        %v322 = vmax.f32 %v303, %v304
        %323 = vmax.xlane.f32.xlu0 %v322
        %v324 = vpop.xlane.xlu0 %323
        %v325 = vmax.f32 %v305, %v306
        %326 = vmax.xlane.f32.xlu0 %v325
        %v327 = vpop.xlane.xlu0 %326
        %v330 = vlaneseq
        %v331 = vand.u32 %v330, 127
        %v332 = vperm.slane %v320, %v331
        %v333 = vadd.s32 %v331, 4294967288
        %v334 = vperm.slane %v321, %v333
        %vm335 = vcmask 130112
        %v336 = vsel %vm335, %v334, %v332
        %v340 = vperm.slane %v324, %v331
        %v341 = vperm.slane %v327, %v333
        %v342 = vsel %vm335, %v341, %v340
        %vm344 = vcmask 1040384
        %v345 = vsel %vm344, %v336, %v342
        %v346 = vld [vmem:[%s1] sm:$0xff]
        %v347 = vld [vmem:[%s1 + $0x8] sm:$0xff]
        %vm348 = vcmask 130048
        %v350 = vsel %vm348, %v345, 0
        %352 = vmatpush.msra.mxu0 0.0
        %353 = vmatpush.msra.mxu0 0.0
        %354 = vmatpush.msra.mxu0 0.0
        %355 = vmatpush.msra.mxu0 0.0
        %356 = vmatpush.msra.mxu0 0.0
        %357 = vmatpush.msra.mxu0 0.0
        %358 = vmatpush.msra.mxu0 0.0
        %359 = vmatpush.msra.mxu0 0.0
        %360 = vmatpush.msra.mxu0 0.0
        %361 = vmatpush.msra.mxu0 0.0
        %362 = vmatpush.msra.mxu0 0.0
        %363 = vmatpush.msra.mxu0 0.0
        %364 = vmatpush.msra.mxu0 0.0
        %365 = vmatpush.msra.mxu0 0.0
        %366 = vmatpush.msra.mxu0 %v347
        %367 = vmatpush.msra.mxu0 %v346
        %368 = vmatmul.f32.gmra.mxu0 %v350
        %v369 = vpop.f32.mrf.mxu0
        %v370 = vadd.f32 0.0, %v369
        %371 = vdwg.mxu0
        %v372 = vmax.f32 %v370, 0.0
        %v373 = vld [vmem:[%s2] sm:$0x3]
        %vm374 = vcmask 15360
        %v376 = vsel %vm374, %v372, 0
        %vm378 = vcmask 1041408
        %v380 = vsel %vm378, %v373, 0
        %382 = vmatpush.msra.mxu0 0.0
        %383 = vmatpush.msra.mxu0 0.0
        %384 = vmatpush.msra.mxu0 0.0
        %385 = vmatpush.msra.mxu0 0.0
        %386 = vmatpush.msra.mxu0 0.0
        %387 = vmatpush.msra.mxu0 0.0
        %388 = vmatpush.msra.mxu0 0.0
        %389 = vmatpush.msra.mxu0 0.0
        %390 = vmatpush.msra.mxu0 0.0
        %391 = vmatpush.msra.mxu0 0.0
        %392 = vmatpush.msra.mxu0 0.0
        %393 = vmatpush.msra.mxu0 0.0
        %394 = vmatpush.msra.mxu0 0.0
        %395 = vmatpush.msra.mxu0 0.0
        %396 = vmatpush.msra.mxu0 0.0
        %397 = vmatpush.msra.mxu0 %v380
        %398 = vmatmul.f32.gmra.mxu0 %v376
        %v399 = vpop.f32.mrf.mxu0
        %v400 = vadd.f32 0.0, %v399
        %401 = vdwg.mxu0
        %v403 = vrot.slane %v400, 1
        %v405 = vadd.f32 %v400, %v403
        %v406 = vmul.f32 %v405, 0.5
        %v407 = vtanh.pop %v406
        %v408 = vadd.f32 %v407, 1.0
        %v409 = vmul.f32 %v408, 0.5
        %v410 = vperm.slane %v409, 0
        %v411 = vlaneseq
        %v412 = vshrl.u32 %v411, 7
        %414 = vset.pattern.permute.xlu0 %v412
        %415 = vperm.xlu0 %414, %v410
        %v416 = vpop.permute.xlu0 %415
        %v417 = vlaneseq
        %v418 = vshrl.u32 %v417, 7
        %v419 = vadd.s32 %v418, 8
        %420 = vset.pattern.permute.xlu0 %v419
        %421 = vperm.xlu0 %420, %v410
        %v422 = vpop.permute.xlu0 %421
        %v423 = vmul.f32 %v303, %v416
        %v424 = vmul.f32 %v304, %v416
        %v425 = vmul.f32 %v305, %v422
        %v426 = vmul.f32 %v306, %v422
        %v427 = vadd.f32 %v423, %v425
        %v428 = vrot.slane %v427, 4
        %v429 = vadd.f32 %v427, %v428
        %v430 = vrot.slane %v429, 2
        %v431 = vadd.f32 %v429, %v430
        %v432 = vrot.slane %v431, 1
        %v433 = vadd.f32 %v431, %v432
        %v434 = vadd.f32 %v424, %v426
        %v435 = vrot.slane %v434, 4
        %v436 = vadd.f32 %v434, %v435
        %v437 = vrot.slane %v436, 2
        %v438 = vadd.f32 %v436, %v437
        %v439 = vrot.slane %v438, 1
        %v440 = vadd.f32 %v438, %v439
        %v441 = vrcp.pop 16.0
        %v442 = vmul.f32 16.0, %v441
        %v443 = vsub.f32 1.0, %v442
        %v444 = vmul.f32 %v441, %v443
        %v445 = vadd.f32 %v441, %v444
        %vm446 = vweird.f32 %v441
        %v447 = vsel %vm446, %v441, %v445
        %v448 = vmul.f32 %v433, %v447
        %v449 = vmul.f32 %v440, %v447
        %v450 = vmax.f32 %v423, %v425
        %v451 = vrot.slane %v450, 4
        %v452 = vmax.f32 %v450, %v451
        %v453 = vrot.slane %v452, 2
        %v454 = vmax.f32 %v452, %v453
        %v455 = vrot.slane %v454, 1
        %v456 = vmax.f32 %v454, %v455
        %v457 = vmax.f32 %v424, %v426
        %v458 = vrot.slane %v457, 4
        %v459 = vmax.f32 %v457, %v458
        %v460 = vrot.slane %v459, 2
        %v461 = vmax.f32 %v459, %v460
        %v462 = vrot.slane %v461, 1
        %v463 = vmax.f32 %v461, %v462
        %v464 = vsel %vm344, %v448, %v456
        %v465 = vsel %vm344, %v449, %v463
        %v466 = vsel %vm344, 0.0, 1.0
        %467 = vrot.lane.b32.xlu0 %v464, 3
        %v468 = vpop.permute.xlu0 %467
        %469 = vrot.lane.b32.xlu0 %v465, 3
        %v470 = vpop.permute.xlu0 %469
        %vm471 = vcmp.lt.s32.totalorder %v331, 3
        %v472 = vsel %vm471, %v468, %v470
        %v473 = vsel %vm471, %v470, %v468
        %v474 = vld [vmem:[%s3] sm:$0x3]
        %v476 = vperm.slane %v474, 0
        %v477 = vperm.slane %v474, 1
        %v480 = vmul.f32 %v476, %v473
        %v481 = vmul.f32 %v477, %v472
        %482 = vrot.lane.b32.xlu0 %v464, 2
        %v483 = vpop.permute.xlu0 %482
        %484 = vrot.lane.b32.xlu0 %v465, 2
        %v485 = vpop.permute.xlu0 %484
        %vm486 = vcmp.lt.s32.totalorder %v331, 2
        %v487 = vsel %vm486, %v483, %v485
        %v488 = vsel %vm486, %v485, %v483
        %s489 = scalar_lea.vmem %s3, 2
        %v490 = vld [vmem:[%s489] sm:$0x3]
        %v492 = vperm.slane %v490, 0
        %v493 = vperm.slane %v490, 1
        %v496 = vmul.f32 %v492, %v488
        %v497 = vmul.f32 %v493, %v487
        %498 = vrot.lane.b32.xlu0 %v464, 1
        %v499 = vpop.permute.xlu0 %498
        %500 = vrot.lane.b32.xlu0 %v465, 1
        %v501 = vpop.permute.xlu0 %500
        %vm502 = vcmp.lt.s32.totalorder %v331, 1
        %v503 = vsel %vm502, %v499, %v501
        %v504 = vsel %vm502, %v501, %v499
        %s505 = scalar_lea.vmem %s3, 4
        %v506 = vld [vmem:[%s505] sm:$0x3]
        %v508 = vperm.slane %v506, 0
        %v509 = vperm.slane %v506, 1
        %v512 = vmul.f32 %v508, %v504
        %v513 = vmul.f32 %v509, %v503
        %s514 = scalar_lea.vmem %s3, 6
        %v515 = vld [vmem:[%s514] sm:$0x3]
        %v517 = vperm.slane %v515, 0
        %v518 = vperm.slane %v515, 1
        %v521 = vmul.f32 %v517, %v464
        %v522 = vmul.f32 %v518, %v465
        %523 = vrot.lane.b32.xlu0 %v464, 127
        %v524 = vpop.permute.xlu0 %523
        %525 = vrot.lane.b32.xlu0 %v465, 127
        %v526 = vpop.permute.xlu0 %525
        %vm527 = vcmp.lt.s32.totalorder %v331, 127
        %v528 = vsel %vm527, %v524, %v526
        %v529 = vsel %vm527, %v526, %v524
        %s530 = scalar_lea.vmem %s3, 8
        %v531 = vld [vmem:[%s530] sm:$0x3]
        %v533 = vperm.slane %v531, 0
        %v534 = vperm.slane %v531, 1
        %v537 = vmul.f32 %v533, %v528
        %v538 = vmul.f32 %v534, %v529
        %539 = vrot.lane.b32.xlu0 %v464, 126
        %v540 = vpop.permute.xlu0 %539
        %541 = vrot.lane.b32.xlu0 %v465, 126
        %v542 = vpop.permute.xlu0 %541
        %vm543 = vcmp.lt.s32.totalorder %v331, 126
        %v544 = vsel %vm543, %v540, %v542
        %v545 = vsel %vm543, %v542, %v540
        %s546 = scalar_lea.vmem %s3, 10
        %v547 = vld [vmem:[%s546] sm:$0x3]
        %v549 = vperm.slane %v547, 0
        %v550 = vperm.slane %v547, 1
        %v553 = vmul.f32 %v549, %v544
        %v554 = vmul.f32 %v550, %v545
        %555 = vrot.lane.b32.xlu0 %v464, 125
        %v556 = vpop.permute.xlu0 %555
        %557 = vrot.lane.b32.xlu0 %v465, 125
        %v558 = vpop.permute.xlu0 %557
        %vm559 = vcmp.lt.s32.totalorder %v331, 125
        %v560 = vsel %vm559, %v556, %v558
        %v561 = vsel %vm559, %v558, %v556
        %s562 = scalar_lea.vmem %s3, 12
        %v563 = vld [vmem:[%s562] sm:$0x3]
        %v565 = vperm.slane %v563, 0
        %v566 = vperm.slane %v563, 1
        %v569 = vmul.f32 %v565, %v560
        %v570 = vmul.f32 %v566, %v561
        %s571 = sld [smem:[#allocation8]]
        %s572 = sld [smem:[#allocation8 + $0x31]]
        %s573 = ssub.f32 %s572, %s571
        %v574 = vstv %s573
        %v575 = vmul.f32 %v574, %v466
        %v576 = vstv %s571
        %v577 = vadd.f32 %v576, %v575
        %579 = vset.pattern.permute.xlu0 0
        %580 = vperm.xlu0 %579, %v577
        %v581 = vpop.permute.xlu0 %580
        %v583 = vmul.f32 %v581, %v480
        %v584 = vmul.f32 %v581, %v481
        %v585 = vadd.f32 %v583, 0.0
        %v586 = vadd.f32 %v584, 0.0
        %s587 = sld [smem:[#allocation8 + $0x1]]
        %s588 = sld [smem:[#allocation8 + $0x32]]
        %s589 = ssub.f32 %s588, %s587
        %v590 = vstv %s589
        %v591 = vmul.f32 %v590, %v466
        %v592 = vstv %s587
        %v593 = vadd.f32 %v592, %v591
        %595 = vset.pattern.permute.xlu0 0
        %596 = vperm.xlu0 %595, %v593
        %v597 = vpop.permute.xlu0 %596
        %v599 = vmul.f32 %v597, %v496
        %v600 = vmul.f32 %v597, %v497
        %v601 = vadd.f32 %v585, %v599
        %v602 = vadd.f32 %v586, %v600
        %s603 = sld [smem:[#allocation8 + $0x2]]
        %s604 = sld [smem:[#allocation8 + $0x33]]
        %s605 = ssub.f32 %s604, %s603
        %v606 = vstv %s605
        %v607 = vmul.f32 %v606, %v466
        %v608 = vstv %s603
        %v609 = vadd.f32 %v608, %v607
        %611 = vset.pattern.permute.xlu0 0
        %612 = vperm.xlu0 %611, %v609
        %v613 = vpop.permute.xlu0 %612
        %v615 = vmul.f32 %v613, %v512
        %v616 = vmul.f32 %v613, %v513
        %v617 = vadd.f32 %v601, %v615
        %v618 = vadd.f32 %v602, %v616
        %s619 = sld [smem:[#allocation8 + $0x3]]
        %s620 = sld [smem:[#allocation8 + $0x34]]
        %s621 = ssub.f32 %s620, %s619
        %v622 = vstv %s621
        %v623 = vmul.f32 %v622, %v466
        %v624 = vstv %s619
        %v625 = vadd.f32 %v624, %v623
        %627 = vset.pattern.permute.xlu0 0
        %628 = vperm.xlu0 %627, %v625
        %v629 = vpop.permute.xlu0 %628
        %v631 = vmul.f32 %v629, %v521
        %v632 = vmul.f32 %v629, %v522
        %v633 = vadd.f32 %v617, %v631
        %v634 = vadd.f32 %v618, %v632
        %s635 = sld [smem:[#allocation8 + $0x4]]
        %s636 = sld [smem:[#allocation8 + $0x35]]
        %s637 = ssub.f32 %s636, %s635
        %v638 = vstv %s637
        %v639 = vmul.f32 %v638, %v466
        %v640 = vstv %s635
        %v641 = vadd.f32 %v640, %v639
        %643 = vset.pattern.permute.xlu0 0
        %644 = vperm.xlu0 %643, %v641
        %v645 = vpop.permute.xlu0 %644
        %v647 = vmul.f32 %v645, %v537
        %v648 = vmul.f32 %v645, %v538
        %v649 = vadd.f32 %v633, %v647
        %v650 = vadd.f32 %v634, %v648
        %s651 = sld [smem:[#allocation8 + $0x5]]
        %s652 = sld [smem:[#allocation8 + $0x36]]
        %s653 = ssub.f32 %s652, %s651
        %v654 = vstv %s653
        %v655 = vmul.f32 %v654, %v466
        %v656 = vstv %s651
        %v657 = vadd.f32 %v656, %v655
        %659 = vset.pattern.permute.xlu0 0
        %660 = vperm.xlu0 %659, %v657
        %v661 = vpop.permute.xlu0 %660
        %v663 = vmul.f32 %v661, %v553
        %v664 = vmul.f32 %v661, %v554
        %v665 = vadd.f32 %v649, %v663
        %v666 = vadd.f32 %v650, %v664
        %s667 = sld [smem:[#allocation8 + $0x6]]
        %s668 = sld [smem:[#allocation8 + $0x37]]
        %s669 = ssub.f32 %s668, %s667
        %v670 = vstv %s669
        %v671 = vmul.f32 %v670, %v466
        %v672 = vstv %s667
        %v673 = vadd.f32 %v672, %v671
        %675 = vset.pattern.permute.xlu0 0
        %676 = vperm.xlu0 %675, %v673
        %v677 = vpop.permute.xlu0 %676
        %v679 = vmul.f32 %v677, %v569
        %v680 = vmul.f32 %v677, %v570
        %v681 = vadd.f32 %v665, %v679
        %v682 = vadd.f32 %v666, %v680
        %683 = vrot.lane.b32.xlu0 %v681, 48
        %v684 = vpop.permute.xlu0 %683
        %685 = vrot.lane.b32.xlu0 %v682, 48
        %v686 = vpop.permute.xlu0 %685
        %vm687 = vcmp.lt.s32.totalorder %v331, 48
        %v688 = vsel %vm687, %v684, %v686
        %v689 = vsel %vm687, %v686, %v684
        %v690 = vld [vmem:[#allocation6] sm:$0x3]
        %v692 = vperm.slane %v690, 0
        %v693 = vperm.slane %v690, 1
        %v696 = vmul.f32 %v692, %v689
        %v697 = vmul.f32 %v693, %v688
        %v698 = vadd.f32 %v696, 0.0
        %v699 = vadd.f32 %v697, 0.0
        %s700 = sld [smem:[#allocation8 + $0x7]]
        %s701 = sld [smem:[#allocation8 + $0x38]]
        %s702 = ssub.f32 %s701, %s700
        %v703 = vstv %s702
        %v704 = vmul.f32 %v703, %v466
        %v705 = vstv %s700
        %v706 = vadd.f32 %v705, %v704
        %708 = vset.pattern.permute.xlu0 0
        %709 = vperm.xlu0 %708, %v706
        %v710 = vpop.permute.xlu0 %709
        %v712 = vmul.f32 %v710, %v480
        %v713 = vmul.f32 %v710, %v481
        %v714 = vadd.f32 %v712, 0.0
        %v715 = vadd.f32 %v713, 0.0
        %s716 = sld [smem:[#allocation8 + $0x8]]
        %s717 = sld [smem:[#allocation8 + $0x39]]
        %s718 = ssub.f32 %s717, %s716
        %v719 = vstv %s718
        %v720 = vmul.f32 %v719, %v466
        %v721 = vstv %s716
        %v722 = vadd.f32 %v721, %v720
        %724 = vset.pattern.permute.xlu0 0
        %725 = vperm.xlu0 %724, %v722
        %v726 = vpop.permute.xlu0 %725
        %v728 = vmul.f32 %v726, %v496
        %v729 = vmul.f32 %v726, %v497
        %v730 = vadd.f32 %v714, %v728
        %v731 = vadd.f32 %v715, %v729
        %s732 = sld [smem:[#allocation8 + $0x9]]
        %s733 = sld [smem:[#allocation8 + $0x3a]]
        %s734 = ssub.f32 %s733, %s732
        %v735 = vstv %s734
        %v736 = vmul.f32 %v735, %v466
        %v737 = vstv %s732
        %v738 = vadd.f32 %v737, %v736
        %740 = vset.pattern.permute.xlu0 0
        %741 = vperm.xlu0 %740, %v738
        %v742 = vpop.permute.xlu0 %741
        %v744 = vmul.f32 %v742, %v512
        %v745 = vmul.f32 %v742, %v513
        %v746 = vadd.f32 %v730, %v744
        %v747 = vadd.f32 %v731, %v745
        %s748 = sld [smem:[#allocation8 + $0xa]]
        %s749 = sld [smem:[#allocation8 + $0x3b]]
        %s750 = ssub.f32 %s749, %s748
        %v751 = vstv %s750
        %v752 = vmul.f32 %v751, %v466
        %v753 = vstv %s748
        %v754 = vadd.f32 %v753, %v752
        %756 = vset.pattern.permute.xlu0 0
        %757 = vperm.xlu0 %756, %v754
        %v758 = vpop.permute.xlu0 %757
        %v760 = vmul.f32 %v758, %v521
        %v761 = vmul.f32 %v758, %v522
        %v762 = vadd.f32 %v746, %v760
        %v763 = vadd.f32 %v747, %v761
        %s764 = sld [smem:[#allocation8 + $0xb]]
        %s765 = sld [smem:[#allocation8 + $0x3c]]
        %s766 = ssub.f32 %s765, %s764
        %v767 = vstv %s766
        %v768 = vmul.f32 %v767, %v466
        %v769 = vstv %s764
        %v770 = vadd.f32 %v769, %v768
        %772 = vset.pattern.permute.xlu0 0
        %773 = vperm.xlu0 %772, %v770
        %v774 = vpop.permute.xlu0 %773
        %v776 = vmul.f32 %v774, %v537
        %v777 = vmul.f32 %v774, %v538
        %v778 = vadd.f32 %v762, %v776
        %v779 = vadd.f32 %v763, %v777
        %s780 = sld [smem:[#allocation8 + $0xc]]
        %s781 = sld [smem:[#allocation8 + $0x3d]]
        %s782 = ssub.f32 %s781, %s780
        %v783 = vstv %s782
        %v784 = vmul.f32 %v783, %v466
        %v785 = vstv %s780
        %v786 = vadd.f32 %v785, %v784
        %788 = vset.pattern.permute.xlu0 0
        %789 = vperm.xlu0 %788, %v786
        %v790 = vpop.permute.xlu0 %789
        %v792 = vmul.f32 %v790, %v553
        %v793 = vmul.f32 %v790, %v554
        %v794 = vadd.f32 %v778, %v792
        %v795 = vadd.f32 %v779, %v793
        %s796 = sld [smem:[#allocation8 + $0xd]]
        %s797 = sld [smem:[#allocation8 + $0x3e]]
        %s798 = ssub.f32 %s797, %s796
        %v799 = vstv %s798
        %v800 = vmul.f32 %v799, %v466
        %v801 = vstv %s796
        %v802 = vadd.f32 %v801, %v800
        %804 = vset.pattern.permute.xlu0 0
        %805 = vperm.xlu0 %804, %v802
        %v806 = vpop.permute.xlu0 %805
        %v808 = vmul.f32 %v806, %v569
        %v809 = vmul.f32 %v806, %v570
        %v810 = vadd.f32 %v794, %v808
        %v811 = vadd.f32 %v795, %v809
        %812 = vrot.lane.b32.xlu0 %v810, 32
        %v813 = vpop.permute.xlu0 %812
        %814 = vrot.lane.b32.xlu0 %v811, 32
        %v815 = vpop.permute.xlu0 %814
        %vm816 = vcmp.lt.s32.totalorder %v331, 32
        %v817 = vsel %vm816, %v813, %v815
        %v818 = vsel %vm816, %v815, %v813
        %s819 = scalar_lea.vmem [#allocation6], 2
        %v820 = vld [vmem:[%s819] sm:$0x3]
        %v822 = vperm.slane %v820, 0
        %v823 = vperm.slane %v820, 1
        %v826 = vmul.f32 %v822, %v818
        %v827 = vmul.f32 %v823, %v817
        %v828 = vadd.f32 %v698, %v826
        %v829 = vadd.f32 %v699, %v827
        %s830 = sld [smem:[#allocation8 + $0xe]]
        %s831 = sld [smem:[#allocation8 + $0x3f]]
        %s832 = ssub.f32 %s831, %s830
        %v833 = vstv %s832
        %v834 = vmul.f32 %v833, %v466
        %v835 = vstv %s830
        %v836 = vadd.f32 %v835, %v834
        %838 = vset.pattern.permute.xlu0 0
        %839 = vperm.xlu0 %838, %v836
        %v840 = vpop.permute.xlu0 %839
        %v842 = vmul.f32 %v840, %v480
        %v843 = vmul.f32 %v840, %v481
        %v844 = vadd.f32 %v842, 0.0
        %v845 = vadd.f32 %v843, 0.0
        %s846 = sld [smem:[#allocation8 + $0xf]]
        %s847 = sld [smem:[#allocation8 + $0x40]]
        %s848 = ssub.f32 %s847, %s846
        %v849 = vstv %s848
        %v850 = vmul.f32 %v849, %v466
        %v851 = vstv %s846
        %v852 = vadd.f32 %v851, %v850
        %854 = vset.pattern.permute.xlu0 0
        %855 = vperm.xlu0 %854, %v852
        %v856 = vpop.permute.xlu0 %855
        %v858 = vmul.f32 %v856, %v496
        %v859 = vmul.f32 %v856, %v497
        %v860 = vadd.f32 %v844, %v858
        %v861 = vadd.f32 %v845, %v859
        %s862 = sld [smem:[#allocation8 + $0x10]]
        %s863 = sld [smem:[#allocation8 + $0x41]]
        %s864 = ssub.f32 %s863, %s862
        %v865 = vstv %s864
        %v866 = vmul.f32 %v865, %v466
        %v867 = vstv %s862
        %v868 = vadd.f32 %v867, %v866
        %870 = vset.pattern.permute.xlu0 0
        %871 = vperm.xlu0 %870, %v868
        %v872 = vpop.permute.xlu0 %871
        %v874 = vmul.f32 %v872, %v512
        %v875 = vmul.f32 %v872, %v513
        %v876 = vadd.f32 %v860, %v874
        %v877 = vadd.f32 %v861, %v875
        %s878 = sld [smem:[#allocation8 + $0x11]]
        %s879 = sld [smem:[#allocation8 + $0x42]]
        %s880 = ssub.f32 %s879, %s878
        %v881 = vstv %s880
        %v882 = vmul.f32 %v881, %v466
        %v883 = vstv %s878
        %v884 = vadd.f32 %v883, %v882
        %886 = vset.pattern.permute.xlu0 0
        %887 = vperm.xlu0 %886, %v884
        %v888 = vpop.permute.xlu0 %887
        %v890 = vmul.f32 %v888, %v521
        %v891 = vmul.f32 %v888, %v522
        %v892 = vadd.f32 %v876, %v890
        %v893 = vadd.f32 %v877, %v891
        %s894 = sld [smem:[#allocation8 + $0x12]]
        %s895 = sld [smem:[#allocation8 + $0x43]]
        %s896 = ssub.f32 %s895, %s894
        %v897 = vstv %s896
        %v898 = vmul.f32 %v897, %v466
        %v899 = vstv %s894
        %v900 = vadd.f32 %v899, %v898
        %902 = vset.pattern.permute.xlu0 0
        %903 = vperm.xlu0 %902, %v900
        %v904 = vpop.permute.xlu0 %903
        %v906 = vmul.f32 %v904, %v537
        %v907 = vmul.f32 %v904, %v538
        %v908 = vadd.f32 %v892, %v906
        %v909 = vadd.f32 %v893, %v907
        %s910 = sld [smem:[#allocation8 + $0x13]]
        %s911 = sld [smem:[#allocation8 + $0x44]]
        %s912 = ssub.f32 %s911, %s910
        %v913 = vstv %s912
        %v914 = vmul.f32 %v913, %v466
        %v915 = vstv %s910
        %v916 = vadd.f32 %v915, %v914
        %918 = vset.pattern.permute.xlu0 0
        %919 = vperm.xlu0 %918, %v916
        %v920 = vpop.permute.xlu0 %919
        %v922 = vmul.f32 %v920, %v553
        %v923 = vmul.f32 %v920, %v554
        %v924 = vadd.f32 %v908, %v922
        %v925 = vadd.f32 %v909, %v923
        %s926 = sld [smem:[#allocation8 + $0x14]]
        %s927 = sld [smem:[#allocation8 + $0x45]]
        %s928 = ssub.f32 %s927, %s926
        %v929 = vstv %s928
        %v930 = vmul.f32 %v929, %v466
        %v931 = vstv %s926
        %v932 = vadd.f32 %v931, %v930
        %934 = vset.pattern.permute.xlu0 0
        %935 = vperm.xlu0 %934, %v932
        %v936 = vpop.permute.xlu0 %935
        %v938 = vmul.f32 %v936, %v569
        %v939 = vmul.f32 %v936, %v570
        %v940 = vadd.f32 %v924, %v938
        %v941 = vadd.f32 %v925, %v939
        %942 = vrot.lane.b32.xlu0 %v940, 16
        %v943 = vpop.permute.xlu0 %942
        %944 = vrot.lane.b32.xlu0 %v941, 16
        %v945 = vpop.permute.xlu0 %944
        %vm946 = vcmp.lt.s32.totalorder %v331, 16
        %v947 = vsel %vm946, %v943, %v945
        %v948 = vsel %vm946, %v945, %v943
        %s949 = scalar_lea.vmem [#allocation6], 4
        %v950 = vld [vmem:[%s949] sm:$0x3]
        %v952 = vperm.slane %v950, 0
        %v953 = vperm.slane %v950, 1
        %v956 = vmul.f32 %v952, %v948
        %v957 = vmul.f32 %v953, %v947
        %v958 = vadd.f32 %v828, %v956
        %v959 = vadd.f32 %v829, %v957
        %s960 = sld [smem:[#allocation8 + $0x15]]
        %s961 = sld [smem:[#allocation8 + $0x46]]
        %s962 = ssub.f32 %s961, %s960
        %v963 = vstv %s962
        %v964 = vmul.f32 %v963, %v466
        %v965 = vstv %s960
        %v966 = vadd.f32 %v965, %v964
        %968 = vset.pattern.permute.xlu0 0
        %969 = vperm.xlu0 %968, %v966
        %v970 = vpop.permute.xlu0 %969
        %v972 = vmul.f32 %v970, %v480
        %v973 = vmul.f32 %v970, %v481
        %v974 = vadd.f32 %v972, 0.0
        %v975 = vadd.f32 %v973, 0.0
        %s976 = sld [smem:[#allocation8 + $0x16]]
        %s977 = sld [smem:[#allocation8 + $0x47]]
        %s978 = ssub.f32 %s977, %s976
        %v979 = vstv %s978
        %v980 = vmul.f32 %v979, %v466
        %v981 = vstv %s976
        %v982 = vadd.f32 %v981, %v980
        %984 = vset.pattern.permute.xlu0 0
        %985 = vperm.xlu0 %984, %v982
        %v986 = vpop.permute.xlu0 %985
        %v988 = vmul.f32 %v986, %v496
        %v989 = vmul.f32 %v986, %v497
        %v990 = vadd.f32 %v974, %v988
        %v991 = vadd.f32 %v975, %v989
        %s992 = sld [smem:[#allocation8 + $0x17]]
        %s993 = sld [smem:[#allocation8 + $0x48]]
        %s994 = ssub.f32 %s993, %s992
        %v995 = vstv %s994
        %v996 = vmul.f32 %v995, %v466
        %v997 = vstv %s992
        %v998 = vadd.f32 %v997, %v996
        %1000 = vset.pattern.permute.xlu0 0
        %1001 = vperm.xlu0 %1000, %v998
        %v1002 = vpop.permute.xlu0 %1001
        %v1004 = vmul.f32 %v1002, %v512
        %v1005 = vmul.f32 %v1002, %v513
        %v1006 = vadd.f32 %v990, %v1004
        %v1007 = vadd.f32 %v991, %v1005
        %s1008 = sld [smem:[#allocation8 + $0x18]]
        %s1009 = sld [smem:[#allocation8 + $0x49]]
        %s1010 = ssub.f32 %s1009, %s1008
        %v1011 = vstv %s1010
        %v1012 = vmul.f32 %v1011, %v466
        %v1013 = vstv %s1008
        %v1014 = vadd.f32 %v1013, %v1012
        %1016 = vset.pattern.permute.xlu0 0
        %1017 = vperm.xlu0 %1016, %v1014
        %v1018 = vpop.permute.xlu0 %1017
        %v1020 = vmul.f32 %v1018, %v521
        %v1021 = vmul.f32 %v1018, %v522
        %v1022 = vadd.f32 %v1006, %v1020
        %v1023 = vadd.f32 %v1007, %v1021
        %s1024 = sld [smem:[#allocation8 + $0x19]]
        %s1025 = sld [smem:[#allocation8 + $0x4a]]
        %s1026 = ssub.f32 %s1025, %s1024
        %v1027 = vstv %s1026
        %v1028 = vmul.f32 %v1027, %v466
        %v1029 = vstv %s1024
        %v1030 = vadd.f32 %v1029, %v1028
        %1032 = vset.pattern.permute.xlu0 0
        %1033 = vperm.xlu0 %1032, %v1030
        %v1034 = vpop.permute.xlu0 %1033
        %v1036 = vmul.f32 %v1034, %v537
        %v1037 = vmul.f32 %v1034, %v538
        %v1038 = vadd.f32 %v1022, %v1036
        %v1039 = vadd.f32 %v1023, %v1037
        %s1040 = sld [smem:[#allocation8 + $0x1a]]
        %s1041 = sld [smem:[#allocation8 + $0x4b]]
        %s1042 = ssub.f32 %s1041, %s1040
        %v1043 = vstv %s1042
        %v1044 = vmul.f32 %v1043, %v466
        %v1045 = vstv %s1040
        %v1046 = vadd.f32 %v1045, %v1044
        %1048 = vset.pattern.permute.xlu0 0
        %1049 = vperm.xlu0 %1048, %v1046
        %v1050 = vpop.permute.xlu0 %1049
        %v1052 = vmul.f32 %v1050, %v553
        %v1053 = vmul.f32 %v1050, %v554
        %v1054 = vadd.f32 %v1038, %v1052
        %v1055 = vadd.f32 %v1039, %v1053
        %s1056 = sld [smem:[#allocation8 + $0x1b]]
        %s1057 = sld [smem:[#allocation8 + $0x4c]]
        %s1058 = ssub.f32 %s1057, %s1056
        %v1059 = vstv %s1058
        %v1060 = vmul.f32 %v1059, %v466
        %v1061 = vstv %s1056
        %v1062 = vadd.f32 %v1061, %v1060
        %1064 = vset.pattern.permute.xlu0 0
        %1065 = vperm.xlu0 %1064, %v1062
        %v1066 = vpop.permute.xlu0 %1065
        %v1068 = vmul.f32 %v1066, %v569
        %v1069 = vmul.f32 %v1066, %v570
        %v1070 = vadd.f32 %v1054, %v1068
        %v1071 = vadd.f32 %v1055, %v1069
        %s1072 = scalar_lea.vmem [#allocation6], 6
        %v1073 = vld [vmem:[%s1072] sm:$0x3]
        %v1075 = vperm.slane %v1073, 0
        %v1076 = vperm.slane %v1073, 1
        %v1079 = vmul.f32 %v1075, %v1070
        %v1080 = vmul.f32 %v1076, %v1071
        %v1081 = vadd.f32 %v958, %v1079
        %v1082 = vadd.f32 %v959, %v1080
        %s1083 = sld [smem:[#allocation8 + $0x1c]]
        %s1084 = sld [smem:[#allocation8 + $0x4d]]
        %s1085 = ssub.f32 %s1084, %s1083
        %v1086 = vstv %s1085
        %v1087 = vmul.f32 %v1086, %v466
        %v1088 = vstv %s1083
        %v1089 = vadd.f32 %v1088, %v1087
        %1091 = vset.pattern.permute.xlu0 0
        %1092 = vperm.xlu0 %1091, %v1089
        %v1093 = vpop.permute.xlu0 %1092
        %v1095 = vmul.f32 %v1093, %v480
        %v1096 = vmul.f32 %v1093, %v481
        %v1097 = vadd.f32 %v1095, 0.0
        %v1098 = vadd.f32 %v1096, 0.0
        %s1099 = sld [smem:[#allocation8 + $0x1d]]
        %s1100 = sld [smem:[#allocation8 + $0x4e]]
        %s1101 = ssub.f32 %s1100, %s1099
        %v1102 = vstv %s1101
        %v1103 = vmul.f32 %v1102, %v466
        %v1104 = vstv %s1099
        %v1105 = vadd.f32 %v1104, %v1103
        %1107 = vset.pattern.permute.xlu0 0
        %1108 = vperm.xlu0 %1107, %v1105
        %v1109 = vpop.permute.xlu0 %1108
        %v1111 = vmul.f32 %v1109, %v496
        %v1112 = vmul.f32 %v1109, %v497
        %v1113 = vadd.f32 %v1097, %v1111
        %v1114 = vadd.f32 %v1098, %v1112
        %s1115 = sld [smem:[#allocation8 + $0x1e]]
        %s1116 = sld [smem:[#allocation8 + $0x4f]]
        %s1117 = ssub.f32 %s1116, %s1115
        %v1118 = vstv %s1117
        %v1119 = vmul.f32 %v1118, %v466
        %v1120 = vstv %s1115
        %v1121 = vadd.f32 %v1120, %v1119
        %1123 = vset.pattern.permute.xlu0 0
        %1124 = vperm.xlu0 %1123, %v1121
        %v1125 = vpop.permute.xlu0 %1124
        %v1127 = vmul.f32 %v1125, %v512
        %v1128 = vmul.f32 %v1125, %v513
        %v1129 = vadd.f32 %v1113, %v1127
        %v1130 = vadd.f32 %v1114, %v1128
        %s1131 = sld [smem:[#allocation8 + $0x1f]]
        %s1132 = sld [smem:[#allocation8 + $0x50]]
        %s1133 = ssub.f32 %s1132, %s1131
        %v1134 = vstv %s1133
        %v1135 = vmul.f32 %v1134, %v466
        %v1136 = vstv %s1131
        %v1137 = vadd.f32 %v1136, %v1135
        %1139 = vset.pattern.permute.xlu0 0
        %1140 = vperm.xlu0 %1139, %v1137
        %v1141 = vpop.permute.xlu0 %1140
        %v1143 = vmul.f32 %v1141, %v521
        %v1144 = vmul.f32 %v1141, %v522
        %v1145 = vadd.f32 %v1129, %v1143
        %v1146 = vadd.f32 %v1130, %v1144
        %s1147 = sld [smem:[#allocation8 + $0x20]]
        %s1148 = sld [smem:[#allocation8 + $0x51]]
        %s1149 = ssub.f32 %s1148, %s1147
        %v1150 = vstv %s1149
        %v1151 = vmul.f32 %v1150, %v466
        %v1152 = vstv %s1147
        %v1153 = vadd.f32 %v1152, %v1151
        %1155 = vset.pattern.permute.xlu0 0
        %1156 = vperm.xlu0 %1155, %v1153
        %v1157 = vpop.permute.xlu0 %1156
        %v1159 = vmul.f32 %v1157, %v537
        %v1160 = vmul.f32 %v1157, %v538
        %v1161 = vadd.f32 %v1145, %v1159
        %v1162 = vadd.f32 %v1146, %v1160
        %s1163 = sld [smem:[#allocation8 + $0x21]]
        %s1164 = sld [smem:[#allocation8 + $0x52]]
        %s1165 = ssub.f32 %s1164, %s1163
        %v1166 = vstv %s1165
        %v1167 = vmul.f32 %v1166, %v466
        %v1168 = vstv %s1163
        %v1169 = vadd.f32 %v1168, %v1167
        %1171 = vset.pattern.permute.xlu0 0
        %1172 = vperm.xlu0 %1171, %v1169
        %v1173 = vpop.permute.xlu0 %1172
        %v1175 = vmul.f32 %v1173, %v553
        %v1176 = vmul.f32 %v1173, %v554
        %v1177 = vadd.f32 %v1161, %v1175
        %v1178 = vadd.f32 %v1162, %v1176
        %s1179 = sld [smem:[#allocation8 + $0x22]]
        %s1180 = sld [smem:[#allocation8 + $0x53]]
        %s1181 = ssub.f32 %s1180, %s1179
        %v1182 = vstv %s1181
        %v1183 = vmul.f32 %v1182, %v466
        %v1184 = vstv %s1179
        %v1185 = vadd.f32 %v1184, %v1183
        %1187 = vset.pattern.permute.xlu0 0
        %1188 = vperm.xlu0 %1187, %v1185
        %v1189 = vpop.permute.xlu0 %1188
        %v1191 = vmul.f32 %v1189, %v569
        %v1192 = vmul.f32 %v1189, %v570
        %v1193 = vadd.f32 %v1177, %v1191
        %v1194 = vadd.f32 %v1178, %v1192
        %1195 = vrot.lane.b32.xlu0 %v1193, 112
        %v1196 = vpop.permute.xlu0 %1195
        %1197 = vrot.lane.b32.xlu0 %v1194, 112
        %v1198 = vpop.permute.xlu0 %1197
        %vm1199 = vcmp.lt.s32.totalorder %v331, 112
        %v1200 = vsel %vm1199, %v1196, %v1198
        %v1201 = vsel %vm1199, %v1198, %v1196
        %s1202 = scalar_lea.vmem [#allocation6], 8
        %v1203 = vld [vmem:[%s1202] sm:$0x3]
        %v1205 = vperm.slane %v1203, 0
        %v1206 = vperm.slane %v1203, 1
        %v1209 = vmul.f32 %v1205, %v1200
        %v1210 = vmul.f32 %v1206, %v1201
        %v1211 = vadd.f32 %v1081, %v1209
        %v1212 = vadd.f32 %v1082, %v1210
        %s1213 = sld [smem:[#allocation8 + $0x23]]
        %s1214 = sld [smem:[#allocation8 + $0x54]]
        %s1215 = ssub.f32 %s1214, %s1213
        %v1216 = vstv %s1215
        %v1217 = vmul.f32 %v1216, %v466
        %v1218 = vstv %s1213
        %v1219 = vadd.f32 %v1218, %v1217
        %1221 = vset.pattern.permute.xlu0 0
        %1222 = vperm.xlu0 %1221, %v1219
        %v1223 = vpop.permute.xlu0 %1222
        %v1225 = vmul.f32 %v1223, %v480
        %v1226 = vmul.f32 %v1223, %v481
        %v1227 = vadd.f32 %v1225, 0.0
        %v1228 = vadd.f32 %v1226, 0.0
        %s1229 = sld [smem:[#allocation8 + $0x24]]
        %s1230 = sld [smem:[#allocation8 + $0x55]]
        %s1231 = ssub.f32 %s1230, %s1229
        %v1232 = vstv %s1231
        %v1233 = vmul.f32 %v1232, %v466
        %v1234 = vstv %s1229
        %v1235 = vadd.f32 %v1234, %v1233
        %1237 = vset.pattern.permute.xlu0 0
        %1238 = vperm.xlu0 %1237, %v1235
        %v1239 = vpop.permute.xlu0 %1238
        %v1241 = vmul.f32 %v1239, %v496
        %v1242 = vmul.f32 %v1239, %v497
        %v1243 = vadd.f32 %v1227, %v1241
        %v1244 = vadd.f32 %v1228, %v1242
        %s1245 = sld [smem:[#allocation8 + $0x25]]
        %s1246 = sld [smem:[#allocation8 + $0x56]]
        %s1247 = ssub.f32 %s1246, %s1245
        %v1248 = vstv %s1247
        %v1249 = vmul.f32 %v1248, %v466
        %v1250 = vstv %s1245
        %v1251 = vadd.f32 %v1250, %v1249
        %1253 = vset.pattern.permute.xlu0 0
        %1254 = vperm.xlu0 %1253, %v1251
        %v1255 = vpop.permute.xlu0 %1254
        %v1257 = vmul.f32 %v1255, %v512
        %v1258 = vmul.f32 %v1255, %v513
        %v1259 = vadd.f32 %v1243, %v1257
        %v1260 = vadd.f32 %v1244, %v1258
        %s1261 = sld [smem:[#allocation8 + $0x26]]
        %s1262 = sld [smem:[#allocation8 + $0x57]]
        %s1263 = ssub.f32 %s1262, %s1261
        %v1264 = vstv %s1263
        %v1265 = vmul.f32 %v1264, %v466
        %v1266 = vstv %s1261
        %v1267 = vadd.f32 %v1266, %v1265
        %1269 = vset.pattern.permute.xlu0 0
        %1270 = vperm.xlu0 %1269, %v1267
        %v1271 = vpop.permute.xlu0 %1270
        %v1273 = vmul.f32 %v1271, %v521
        %v1274 = vmul.f32 %v1271, %v522
        %v1275 = vadd.f32 %v1259, %v1273
        %v1276 = vadd.f32 %v1260, %v1274
        %s1277 = sld [smem:[#allocation8 + $0x27]]
        %s1278 = sld [smem:[#allocation8 + $0x58]]
        %s1279 = ssub.f32 %s1278, %s1277
        %v1280 = vstv %s1279
        %v1281 = vmul.f32 %v1280, %v466
        %v1282 = vstv %s1277
        %v1283 = vadd.f32 %v1282, %v1281
        %1285 = vset.pattern.permute.xlu0 0
        %1286 = vperm.xlu0 %1285, %v1283
        %v1287 = vpop.permute.xlu0 %1286
        %v1289 = vmul.f32 %v1287, %v537
        %v1290 = vmul.f32 %v1287, %v538
        %v1291 = vadd.f32 %v1275, %v1289
        %v1292 = vadd.f32 %v1276, %v1290
        %s1293 = sld [smem:[#allocation8 + $0x28]]
        %s1294 = sld [smem:[#allocation8 + $0x59]]
        %s1295 = ssub.f32 %s1294, %s1293
        %v1296 = vstv %s1295
        %v1297 = vmul.f32 %v1296, %v466
        %v1298 = vstv %s1293
        %v1299 = vadd.f32 %v1298, %v1297
        %1301 = vset.pattern.permute.xlu0 0
        %1302 = vperm.xlu0 %1301, %v1299
        %v1303 = vpop.permute.xlu0 %1302
        %v1305 = vmul.f32 %v1303, %v553
        %v1306 = vmul.f32 %v1303, %v554
        %v1307 = vadd.f32 %v1291, %v1305
        %v1308 = vadd.f32 %v1292, %v1306
        %s1309 = sld [smem:[#allocation8 + $0x29]]
        %s1310 = sld [smem:[#allocation8 + $0x5a]]
        %s1311 = ssub.f32 %s1310, %s1309
        %v1312 = vstv %s1311
        %v1313 = vmul.f32 %v1312, %v466
        %v1314 = vstv %s1309
        %v1315 = vadd.f32 %v1314, %v1313
        %1317 = vset.pattern.permute.xlu0 0
        %1318 = vperm.xlu0 %1317, %v1315
        %v1319 = vpop.permute.xlu0 %1318
        %v1321 = vmul.f32 %v1319, %v569
        %v1322 = vmul.f32 %v1319, %v570
        %v1323 = vadd.f32 %v1307, %v1321
        %v1324 = vadd.f32 %v1308, %v1322
        %1325 = vrot.lane.b32.xlu0 %v1323, 96
        %v1326 = vpop.permute.xlu0 %1325
        %1327 = vrot.lane.b32.xlu0 %v1324, 96
        %v1328 = vpop.permute.xlu0 %1327
        %vm1329 = vcmp.lt.s32.totalorder %v331, 96
        %v1330 = vsel %vm1329, %v1326, %v1328
        %v1331 = vsel %vm1329, %v1328, %v1326
        %s1332 = scalar_lea.vmem [#allocation6], 10
        %v1333 = vld [vmem:[%s1332] sm:$0x3]
        %v1335 = vperm.slane %v1333, 0
        %v1336 = vperm.slane %v1333, 1
        %v1339 = vmul.f32 %v1335, %v1330
        %v1340 = vmul.f32 %v1336, %v1331
        %v1341 = vadd.f32 %v1211, %v1339
        %v1342 = vadd.f32 %v1212, %v1340
        %s1343 = sld [smem:[#allocation8 + $0x2a]]
        %s1344 = sld [smem:[#allocation8 + $0x5b]]
        %s1345 = ssub.f32 %s1344, %s1343
        %v1346 = vstv %s1345
        %v1347 = vmul.f32 %v1346, %v466
        %v1348 = vstv %s1343
        %v1349 = vadd.f32 %v1348, %v1347
        %1351 = vset.pattern.permute.xlu0 0
        %1352 = vperm.xlu0 %1351, %v1349
        %v1353 = vpop.permute.xlu0 %1352
        %v1355 = vmul.f32 %v1353, %v480
        %v1356 = vmul.f32 %v1353, %v481
        %v1357 = vadd.f32 %v1355, 0.0
        %v1358 = vadd.f32 %v1356, 0.0
        %s1359 = sld [smem:[#allocation8 + $0x2b]]
        %s1360 = sld [smem:[#allocation8 + $0x5c]]
        %s1361 = ssub.f32 %s1360, %s1359
        %v1362 = vstv %s1361
        %v1363 = vmul.f32 %v1362, %v466
        %v1364 = vstv %s1359
        %v1365 = vadd.f32 %v1364, %v1363
        %1367 = vset.pattern.permute.xlu0 0
        %1368 = vperm.xlu0 %1367, %v1365
        %v1369 = vpop.permute.xlu0 %1368
        %v1371 = vmul.f32 %v1369, %v496
        %v1372 = vmul.f32 %v1369, %v497
        %v1373 = vadd.f32 %v1357, %v1371
        %v1374 = vadd.f32 %v1358, %v1372
        %s1375 = sld [smem:[#allocation8 + $0x2c]]
        %s1376 = sld [smem:[#allocation8 + $0x5d]]
        %s1377 = ssub.f32 %s1376, %s1375
        %v1378 = vstv %s1377
        %v1379 = vmul.f32 %v1378, %v466
        %v1380 = vstv %s1375
        %v1381 = vadd.f32 %v1380, %v1379
        %1383 = vset.pattern.permute.xlu0 0
        %1384 = vperm.xlu0 %1383, %v1381
        %v1385 = vpop.permute.xlu0 %1384
        %v1387 = vmul.f32 %v1385, %v512
        %v1388 = vmul.f32 %v1385, %v513
        %v1389 = vadd.f32 %v1373, %v1387
        %v1390 = vadd.f32 %v1374, %v1388
        %s1391 = sld [smem:[#allocation8 + $0x2d]]
        %s1392 = sld [smem:[#allocation8 + $0x5e]]
        %s1393 = ssub.f32 %s1392, %s1391
        %v1394 = vstv %s1393
        %v1395 = vmul.f32 %v1394, %v466
        %v1396 = vstv %s1391
        %v1397 = vadd.f32 %v1396, %v1395
        %1399 = vset.pattern.permute.xlu0 0
        %1400 = vperm.xlu0 %1399, %v1397
        %v1401 = vpop.permute.xlu0 %1400
        %v1403 = vmul.f32 %v1401, %v521
        %v1404 = vmul.f32 %v1401, %v522
        %v1405 = vadd.f32 %v1389, %v1403
        %v1406 = vadd.f32 %v1390, %v1404
        %s1407 = sld [smem:[#allocation8 + $0x2e]]
        %s1408 = sld [smem:[#allocation8 + $0x5f]]
        %s1409 = ssub.f32 %s1408, %s1407
        %v1410 = vstv %s1409
        %v1411 = vmul.f32 %v1410, %v466
        %v1412 = vstv %s1407
        %v1413 = vadd.f32 %v1412, %v1411
        %1415 = vset.pattern.permute.xlu0 0
        %1416 = vperm.xlu0 %1415, %v1413
        %v1417 = vpop.permute.xlu0 %1416
        %v1419 = vmul.f32 %v1417, %v537
        %v1420 = vmul.f32 %v1417, %v538
        %v1421 = vadd.f32 %v1405, %v1419
        %v1422 = vadd.f32 %v1406, %v1420
        %s1423 = sld [smem:[#allocation8 + $0x2f]]
        %s1424 = sld [smem:[#allocation8 + $0x60]]
        %s1425 = ssub.f32 %s1424, %s1423
        %v1426 = vstv %s1425
        %v1427 = vmul.f32 %v1426, %v466
        %v1428 = vstv %s1423
        %v1429 = vadd.f32 %v1428, %v1427
        %1431 = vset.pattern.permute.xlu0 0
        %1432 = vperm.xlu0 %1431, %v1429
        %v1433 = vpop.permute.xlu0 %1432
        %v1435 = vmul.f32 %v1433, %v553
        %v1436 = vmul.f32 %v1433, %v554
        %v1437 = vadd.f32 %v1421, %v1435
        %v1438 = vadd.f32 %v1422, %v1436
        %s1439 = sld [smem:[#allocation8 + $0x30]]
        %s1440 = sld [smem:[#allocation8 + $0x61]]
        %s1441 = ssub.f32 %s1440, %s1439
        %v1442 = vstv %s1441
        %v1443 = vmul.f32 %v1442, %v466
        %v1444 = vstv %s1439
        %v1445 = vadd.f32 %v1444, %v1443
        %1447 = vset.pattern.permute.xlu0 0
        %1448 = vperm.xlu0 %1447, %v1445
        %v1449 = vpop.permute.xlu0 %1448
        %v1451 = vmul.f32 %v1449, %v569
        %v1452 = vmul.f32 %v1449, %v570
        %v1453 = vadd.f32 %v1437, %v1451
        %v1454 = vadd.f32 %v1438, %v1452
        %1455 = vrot.lane.b32.xlu0 %v1453, 80
        %v1456 = vpop.permute.xlu0 %1455
        %1457 = vrot.lane.b32.xlu0 %v1454, 80
        %v1458 = vpop.permute.xlu0 %1457
        %vm1459 = vcmp.lt.s32.totalorder %v331, 80
        %v1460 = vsel %vm1459, %v1456, %v1458
        %v1461 = vsel %vm1459, %v1458, %v1456
        %s1462 = scalar_lea.vmem [#allocation6], 12
        %v1463 = vld [vmem:[%s1462] sm:$0x3]
        %v1465 = vperm.slane %v1463, 0
        %v1466 = vperm.slane %v1463, 1
        %v1469 = vmul.f32 %v1465, %v1460
        %v1470 = vmul.f32 %v1466, %v1461
        %v1471 = vadd.f32 %v1341, %v1469
        %v1472 = vadd.f32 %v1342, %v1470
        %v1475 = vrot.slane %v1471, 1
        %v1476 = vrot.slane %v1472, 1
        %v1479 = vadd.f32 %v1471, %v1475
        %v1480 = vadd.f32 %v1472, %v1476
        %v1481 = vmul.f32 %v1479, 0.5
        %v1482 = vmul.f32 %v1480, 0.5
        %v1483 = vtanh.pop %v1481
        %v1484 = vtanh.pop %v1482
        %v1485 = vadd.f32 %v1483, 1.0
        %v1486 = vadd.f32 %v1484, 1.0
        %v1487 = vmul.f32 %v1485, 0.5
        %v1488 = vmul.f32 %v1486, 0.5
        %v1489 = vperm.slane %v1487, 0
        %v1490 = vperm.slane %v1488, 0
        %v1491 = vmul.f32 %v423, %v1489
        %v1492 = vmul.f32 %v424, %v1490
        %v1493 = vmul.f32 %v425, %v1489
        %v1494 = vmul.f32 %v426, %v1490
        %1495 = vst [vmem:[%s302] sm:$0xff] %v1491
        %1496 = vst [vmem:[%s302 + $0x8] sm:$0xff] %v1492
        %1497 = vst [vmem:[%s302 + $0x10] sm:$0xff] %v1493
        %1498 = vst [vmem:[%s302 + $0x18] sm:$0xff] %v1494
        %s1499 = sand.u32 %s164, 1
        %s1500 = scalar_lea.sflag [#allocation4], %s1499
        %s1501 = sand.u32 %s164, 1
        %s1502 = smul.addr %s1501, 32
        %s1503 = scalar_lea.vmem [#allocation9], %s1502
        // Predicated region
        $region57: #{tpu_custom_call.1} parent=43 // pred_check
          %p1504 = pneg %p174
        $region58: #{tpu_custom_call.1} parent=43 // pred_check_branch
          %1506 = sbr.rel (%p1504) target = $region60
        $region59: #{tpu_custom_call.1} parent=43 // pred_region
          %1508 = vsyncadd %s1500, 0
          %s1509 = smul.addr %s25, 4
          %s1510 = smul.addr %s1509, 8
          %s1511 = scalar_lea.hbm %s6, %s1510
          %s1512 = sshll.u32 %s1503, 4
          %s1513 = int_to_ptr.vmem [resolvable:$true] %s1512
          %s1514 = sshll.u32 %s1511, 4
          %s1515 = int_to_ptr.hbm [resolvable:$true] %s1514
          %1520 = dma.vmem_to_hbm [thread:$0]  %s1513, 512, %s1515, %s1500, 256, 256, 16
        $region60: #{tpu_custom_call.1} parent=43 // pred_fallthru
          _
      $region44: #{tpu_custom_call.1} parent=5 // pred_fallthru
        _
      %p1521 = scmp.le.s32.totalorder 2, %s20
      // Predicated region
      $region61: #{tpu_custom_call.1} parent=5 // pred_check
        %p1522 = pneg %p1521
      $region62: #{tpu_custom_call.1} parent=5 // pred_check_branch
        %1524 = sbr.rel (%p1522) target = $region64
      $region63: #{tpu_custom_call.1} parent=5 // pred_region
        %s1525 = ssub.s32 %s20, 2
        // Predicated region
        $region65: #{tpu_custom_call.1} parent=63 // pred_check
          %p1526 = pneg %p180
        $region66: #{tpu_custom_call.1} parent=63 // pred_check_branch
          %1528 = sbr.rel (%p1526) target = $region68
        $region67: #{tpu_custom_call.1} parent=63 // pred_region
          %s1529 = sand.u32 %s165, 1
          %s1530 = scalar_lea.sflag [#allocation4], %s1529
          %s1531 = sand.u32 %s165, 1
          %s1532 = smul.addr %s1531, 32
          %s1533 = scalar_lea.vmem [#allocation9], %s1532
          %1535 = dma.done %s1530, 512
        $region68: #{tpu_custom_call.1} parent=63 // pred_fallthru
          _
      $region64: #{tpu_custom_call.1} parent=5 // pred_fallthru
        _
    $region6: #{tpu_custom_call.1} parent=1 // loop_footer
      %s24 = sadd.s32 1, %s20
    $region7: #{tpu_custom_call.1} parent=1 // loop_footer_branch
      %19 = sbr.rel target = $region3
    $region8: #{tpu_custom_call.1} parent=1 // loop_exit
      _
    %1536 = vsyncpa [#allocation3], 1
    %s1537 = scalar_lea.sflag [#allocation3], 1
    %1538 = vsyncpa %s1537, 1
    %1539 = vsyncpa [#allocation7], 1
    %1540 = vsyncpa [#allocation4], 1
    %s1541 = scalar_lea.sflag [#allocation4], 1
    %1542 = vsyncpa %s1541, 1
    %1543 = vsyncpa [#allocation5], 1
    %s1544 = scalar_lea.sflag [#allocation5], 1
    %1545 = vsyncpa %s1544, 1

</llo_original>
